<compile_context>
chip_gen: v6e
topology: v6e:2x2x1
jax: 0.10.0
libtpu: 0.0.40
codegen_flags: <defaults>
</compile_context>

<pallas_src>
import functools

import numpy as np

import jax
import jax.numpy as jnp
from jax import lax
from jax.experimental import pallas as pl
from jax.experimental.pallas import tpu as pltpu

KSIZE = 7
PAD = (KSIZE - 1) // 2      # 3
CHUNK = 8                   # sublane-tile sized channel chunk
FORI_THRESHOLD = 8          # above this many chunks, use lax.fori_loop


def _channel_max_sum(x_ref, C):
    """Fused one-pass channel max / sum over the (C, thw) lane-dense block.

    Running (CHUNK, thw) accumulators keep per-chunk work on the VALU
    (pairwise max/add); the cross-sublane (XLU) reduction happens exactly once
    at the end. Returns ((1, thw) max, (1, thw) sum), both f32.
    """
    def load(lo, n):
        return x_ref[pl.ds(lo, n), :].astype(jnp.float32)

    if C <= CHUNK:
        xb = load(0, C)
        return (jnp.max(xb, axis=0, keepdims=True),
                jnp.sum(xb, axis=0, keepdims=True))

    n_full = C // CHUNK
    x0 = load(0, CHUNK)
    if n_full - 1 > FORI_THRESHOLD:
        def body(ci, carry):
            rmax, rsum = carry
            lo = pl.multiple_of(ci * CHUNK, CHUNK)
            xb = load(lo, CHUNK)
            return jnp.maximum(rmax, xb), rsum + xb
        rmax, rsum = lax.fori_loop(1, n_full, body, (x0, x0), unroll=2)
    else:
        rmax, rsum = x0, x0
        for ci in range(1, n_full):
            xb = load(ci * CHUNK, CHUNK)
            rmax, rsum = jnp.maximum(rmax, xb), rsum + xb

    cmax = jnp.max(rmax, axis=0, keepdims=True)
    csum = jnp.sum(rsum, axis=0, keepdims=True)

    tail = C - n_full * CHUNK
    if tail:
        xt = load(n_full * CHUNK, tail)
        cmax = jnp.maximum(cmax, jnp.max(xt, axis=0, keepdims=True))
        csum = csum + jnp.sum(xt, axis=0, keepdims=True)
    return cmax, csum


def spatial_gate_kernel(x_ref, hmap_ref, w_ref, b_ref, o_ref, pad_ref, attn_ref,
                        *, tile_h, W, C):
    # x_ref:    (C, tile_h*W)          VMEM lane-dense band of one image
    # hmap_ref: (2, 6, W)              VMEM f32 halo max/mean rows (0 outside image)
    # w_ref:    (2*7*7,)               SMEM conv weight, OIHW flattened
    # b_ref:    (1,)                   SMEM conv bias
    # o_ref:    (C, tile_h*W)          VMEM gated output band
    # pad_ref:  (2, tile_h+6, W+6)     VMEM zero-padded 2-channel conv input
    # attn_ref: (1, tile_h*W)          VMEM flattened attention row (x dtype)
    thw = tile_h * W

    # 1. Border-only clear: just the 3-wide left/right column strips need to
    #    be zero; every row's interior (halo + band) is rewritten below.
    #    Runs every step -> safe if the parallel grid is split across cores.
    zcols = jnp.zeros((2, tile_h + 2 * PAD, PAD), jnp.float32)
    pad_ref[:, :, 0:PAD] = zcols
    pad_ref[:, :, PAD + W:PAD + W + PAD] = zcols

    # 2. Fused single-pass channel max / mean of the band (f32 accumulation).
    cmax, csum = _channel_max_sum(x_ref, C)
    cmean = csum * (1.0 / C)

    # 3. Scatter the flat (1, thw) band rows into the padded 2-D interior and
    #    the precomputed halo rows into the 3-row strips above/below.
    for i in range(tile_h):
        sl = slice(i * W, (i + 1) * W)
        pad_ref[0, PAD + i:PAD + i + 1, PAD:PAD + W] = cmax[:, sl]
        pad_ref[1, PAD + i:PAD + i + 1, PAD:PAD + W] = cmean[:, sl]
    hmap = hmap_ref[...]                                   # (2, 6, W) f32
    pad_ref[0, 0:PAD, PAD:PAD + W] = hmap[0, 0:PAD, :]
    pad_ref[0, PAD + tile_h:PAD + tile_h + PAD, PAD:PAD + W] = hmap[0, PAD:2 * PAD, :]
    pad_ref[1, 0:PAD, PAD:PAD + W] = hmap[1, 0:PAD, :]
    pad_ref[1, PAD + tile_h:PAD + tile_h + PAD, PAD:PAD + W] = hmap[1, PAD:2 * PAD, :]

    # 4. 7x7 conv, shift-and-add (HBM-bound op; MXU not worth it). Lane (dj)
    #    shifts hoisted out of the row (di) loop; accumulator count adapts to
    #    band size to stay within the vreg file.
    n_acc = 4 if thw * 4 <= 32 * 1024 else 2
    accs = [jnp.zeros((tile_h, W), jnp.float32) for _ in range(n_acc)]
    tap = 0
    for c in range(2):
        for dj in range(KSIZE):
            col = pad_ref[c, :, dj:dj + W]                 # (tile_h+6, W)
            for di in range(KSIZE):
                wgt = w_ref[c * KSIZE * KSIZE + di * KSIZE + dj]
                accs[tap % n_acc] = accs[tap % n_acc] + wgt * col[di:di + tile_h, :]
                tap += 1
    if n_acc == 4:
        tot = (accs[0] + accs[1]) + (accs[2] + accs[3])
    else:
        tot = accs[0] + accs[1]
    attn2d = jax.nn.sigmoid(tot + b_ref[0]).astype(o_ref.dtype)

    # 5. Flatten back to the lane-dense (1, thw) row, already in the input
    #    dtype so the gating multiplies without per-chunk up/down casts.
    for i in range(tile_h):
        attn_ref[:, i * W:(i + 1) * W] = attn2d[i:i + 1, :]
    attn_row = attn_ref[...]                               # (1, thw)

    # 6. Lane-dense gating: broadcast the attention row once (JAX does not CSE
    #    broadcast_in_dim), then stream x in 8-row chunks with full-width
    #    stores; fori_loop bounds live ranges at large C.
    if C <= CHUNK:
        o_ref[...] = x_ref[...] * attn_row
    else:
        attn_b = jnp.broadcast_to(attn_row, (CHUNK, thw))
        n_full = C // CHUNK
        if n_full > FORI_THRESHOLD:
            def gate(ci, carry):
                lo = pl.multiple_of(ci * CHUNK, CHUNK)
                o_ref[pl.ds(lo, CHUNK), :] = x_ref[pl.ds(lo, CHUNK), :] * attn_b
                return carry
            lax.fori_loop(0, n_full, gate, 0, unroll=2)
        else:
            for ci in range(n_full):
                lo = ci * CHUNK
                o_ref[lo:lo + CHUNK, :] = x_ref[lo:lo + CHUNK, :] * attn_b
        tail = C - n_full * CHUNK
        if tail:
            lo = n_full * CHUNK
            o_ref[lo:C, :] = x_ref[lo:C, :] * attn_b[0:tail, :]


def _pick_tile_h(H, W, C, itemsize):
    """Pick the H band size: big enough to amortize per-step overhead, small
    enough to bound per-step VMEM (v7x: 64 MiB) and conv vreg pressure, while
    keeping bands lane-dense ((t*W) % 128 == 0) and t | H."""
    target_bytes = 2 * 1024 * 1024          # per-band x block (~8 MiB across buffers)
    max_band_elems = 8 * 1024               # bounds conv accumulators / unrolled loops
    valid = [t for t in range(1, H + 1)
             if H % t == 0 and ((t * W) % 128 == 0 or t == H)]
    for t in valid:
        if t == H:
            break
        if C * t * W * itemsize >= target_bytes or t * W >= max_band_elems:
            return t
    # Whole image is small: still prefer >=2 bands (pipeline overlap, work for
    # a second TensorCore even at N == 1) if a lane-dense sub-band exists.
    sub = [t for t in valid if t < H]
    return sub[-1] if sub else H


@jax.jit
def spatial_gate(x, w, b):
    """x: (N, C, H, W), w: (1, 2, 7, 7) f32, b: (1,) f32."""
    N, C, H, W = x.shape
    HW = H * W
    itemsize = x.dtype.itemsize
    tile_h = _pick_tile_h(H, W, C, itemsize)
    nt = H // tile_h
    thw = tile_h * W

    x_flat = x.reshape(N, C, HW)                  # contiguous -> free reshape
    w_flat = w.reshape(-1).astype(jnp.float32)    # OIHW row-major -> (98,)
    b_flat = b.reshape(-1).astype(jnp.float32)

    # Halo max/mean rows (3 above + 3 below each band), computed in plain JAX
    # from just the 6 boundary rows per band (~6/tile_h of x re-read); rows
    # outside the image are zeroed so conv zero-padding is automatic. x itself
    # is streamed through the kernel exactly once.
    ids = np.concatenate(
        [np.arange(nt)[:, None] * tile_h - PAD + np.arange(PAD)[None, :],
         (np.arange(nt)[:, None] + 1) * tile_h + np.arange(PAD)[None, :]],
        axis=1)                                             # (nt, 6), may be OOB
    valid_rows = ((ids >= 0) & (ids < H)).reshape(-1)
    ids_c = np.clip(ids, 0, H - 1).reshape(-1)
    halo_x = x[:, :, ids_c, :]                              # (N, C, nt*6, W)
    hmax = jnp.max(halo_x, axis=1)
    hmean = jnp.mean(halo_x, axis=1)
    hmap = jnp.stack([hmax, hmean], axis=1).astype(jnp.float32)   # (N, 2, nt*6, W)
    hmap = hmap * jnp.asarray(valid_rows, jnp.float32)[None, None, :, None]
    hmap = hmap.reshape(N, 2, nt, 2 * PAD, W).transpose(0, 2, 1, 3, 4)
    hmap = hmap.reshape(N * nt, 2, 2 * PAD, W)

    kernel = functools.partial(spatial_gate_kernel, tile_h=tile_h, W=W, C=C)

    # VMEM limit from the actual double-buffered block sizes, capped per chip
    # generation (~48 MiB on v7x's 64 MiB VMEM, ~96 MiB on v5e/v6e's 128 MiB).
    band_bytes = C * thw * itemsize
    hmap_bytes = 2 * 2 * PAD * W * 4
    scratch_bytes = 2 * (tile_h + 2 * PAD) * (W + 2 * PAD) * 4 + thw * itemsize
    need = 2 * (2 * band_bytes + hmap_bytes) + scratch_bytes + (2 << 20)
    try:
        phys = pltpu.get_tpu_info().vmem_capacity_bytes
    except Exception:
        phys = 64 * 1024 * 1024        # assume the smallest (v7x) if query fails
    cap = (phys * 3) // 4
    vmem_limit = int(min(max(need, 16 * 1024 * 1024), cap))

    out_flat = pl.pallas_call(
        kernel,
        out_shape=jax.ShapeDtypeStruct((N, C, HW), x.dtype),
        grid=(N, nt),
        in_specs=[
            pl.BlockSpec((None, C, thw), lambda n, h: (n, 0, h)),
            pl.BlockSpec((None, 2, 2 * PAD, W), lambda n, h: (n * nt + h, 0, 0, 0)),
            pl.BlockSpec(memory_space=pltpu.MemorySpace.SMEM),
            pl.BlockSpec(memory_space=pltpu.MemorySpace.SMEM),
        ],
        out_specs=pl.BlockSpec((None, C, thw), lambda n, h: (n, 0, h)),
        scratch_shapes=[
            pltpu.VMEM((2, tile_h + 2 * PAD, W + 2 * PAD), jnp.float32),
            pltpu.VMEM((1, thw), x.dtype),
        ],
        compiler_params=pltpu.CompilerParams(
            dimension_semantics=("parallel", "parallel"),
            vmem_limit_bytes=vmem_limit),
    )(x_flat, hmap, w_flat, b_flat)

    return out_flat.reshape(N, C, H, W)


def spatial_gate_reference(x, w, b):
    """Plain-JAX reference matching the PyTorch forward."""
    cmax = jnp.max(x, axis=1, keepdims=True)
    cmean = jnp.mean(x, axis=1, keepdims=True)
    feat = jnp.concatenate([cmax, cmean], axis=1)           # (N, 2, H, W)
    attn = jax.lax.conv_general_dilated(
        feat, w, window_strides=(1, 1), padding=[(PAD, PAD), (PAD, PAD)],
        dimension_numbers=("NCHW", "OIHW", "NCHW"))
    attn = attn + b.reshape(1, 1, 1, 1)
    attn = jax.nn.sigmoid(attn)
    return x * attn


if __name__ == "__main__":
    key = jax.random.PRNGKey(0)
    kx, kw, kb, kx2 = jax.random.split(key, 4)

    # Deterministic parameter init (Conv2d(2, 1, 7, padding=3, bias=True)).
    fan_in = 2 * KSIZE * KSIZE
    bound = 1.0 / (fan_in ** 0.5)
    w = jax.random.uniform(kw, (1, 2, KSIZE, KSIZE), jnp.float32, -bound, bound)
    b = jax.random.uniform(kb, (1,), jnp.float32, -bound, bound)

    def check(xv):
        out = jax.block_until_ready(spatial_gate(xv, w, b))
        ref = jax.block_until_ready(spatial_gate_reference(xv, w, b))
        assert out.shape == ref.shape and out.dtype == ref.dtype
        err = float(jnp.max(jnp.abs(out - ref)))
        assert jnp.allclose(out, ref, atol=2e-5, rtol=1e-5), err

    # Primary small config (module's expected usage); H-tiles into 2 bands.
    check(jax.random.normal(kx, (2, 4, 16, 16), dtype=jnp.float32))
    # Secondary config exercising the chunked/fori channel loops, the channel
    # tail (C % 8 != 0) and the halo bands with a larger channel count.
    check(jax.random.normal(kx2, (1, 84, 16, 16), dtype=jnp.float32))

    print("KERNEL_OK")
</pallas_src>

<mosaic_0001>
module attributes {stable_mosaic.version = 11 : i64} {
  func.func @spatial_gate_kernel(%arg0: i32, %arg1: i32, %arg2: memref<1x4x128xf32, #tpu.memory_space<vmem>>, %arg3: memref<1x2x6x16xf32, #tpu.memory_space<vmem>>, %arg4: memref<98xf32, #tpu.memory_space<smem>>, %arg5: memref<1xf32, #tpu.memory_space<smem>>, %arg6: memref<1x4x128xf32, #tpu.memory_space<vmem>>, %arg7: memref<2x14x22xf32, #tpu.memory_space<vmem>>, %arg8: memref<1x128xf32, #tpu.memory_space<vmem>>) attributes {dimension_semantics = [#tpu.dimension_semantics<parallel>, #tpu.dimension_semantics<parallel>], iteration_bounds = array<i64: 2, 2>, scalar_prefetch = 0 : i64, scratch_operands = 2 : i64, tpu.core_type = #tpu.core_type<tc>, window_params = [{transform_indices = @transform_0, window_bounds = array<i64: 1, 4, 128>}, {transform_indices = @transform_1, window_bounds = array<i64: 1, 2, 6, 16>}, {transform_indices = @transform_2, window_bounds = array<i64: 98>}, {transform_indices = @transform_3, window_bounds = array<i64: 1>}, {transform_indices = @transform_4, window_bounds = array<i64: 1, 4, 128>}]} {
    %cst = arith.constant 0.000000e+00 : f32
    %0 = vector.broadcast %cst : f32 to vector<2x14x3xf32>
    %c0 = arith.constant 0 : index
    %c0_0 = arith.constant 0 : index
    %c0_1 = arith.constant 0 : index
    %1 = vector.load %arg7[%c0, %c0_0, %c0_1] : memref<2x14x22xf32, #tpu.memory_space<vmem>>, vector<2x14x3xf32>
    tpu.vector_store %arg7[%c0, %c0_0, %c0_1], %0 {strides = array<i32>} : memref<2x14x22xf32, #tpu.memory_space<vmem>>, vector<2x14x3xf32>,
    %c0_2 = arith.constant 0 : index
    %c0_3 = arith.constant 0 : index
    %c19 = arith.constant 19 : index
    %2 = vector.load %arg7[%c0_2, %c0_3, %c19] : memref<2x14x22xf32, #tpu.memory_space<vmem>>, vector<2x14x3xf32>
    tpu.vector_store %arg7[%c0_2, %c0_3, %c19], %0 {strides = array<i32>} : memref<2x14x22xf32, #tpu.memory_space<vmem>>, vector<2x14x3xf32>,
    %c0_4 = arith.constant 0 : index
    %c0_5 = arith.constant 0 : index
    %c0_6 = arith.constant 0 : index
    %3 = vector.load %arg2[%c0_4, %c0_5, %c0_6] : memref<1x4x128xf32, #tpu.memory_space<vmem>>, vector<1x4x128xf32>
    %4 = vector.shape_cast %3 : vector<1x4x128xf32> to vector<4x128xf32>
    %cst_7 = arith.constant dense<0xFF800000> : vector<128xf32>
    %5 = vector.multi_reduction <maximumf>, %4, %cst_7 [0] : vector<4x128xf32> to vector<128xf32>
    %6 = vector.shape_cast %5 : vector<128xf32> to vector<1x128xf32>
    %cst_8 = arith.constant dense<0.000000e+00> : vector<128xf32>
    %7 = vector.multi_reduction <add>, %4, %cst_8 [0] : vector<4x128xf32> to vector<128xf32>
    %8 = vector.shape_cast %7 : vector<128xf32> to vector<1x128xf32>
    %cst_9 = arith.constant 2.500000e-01 : f32
    %9 = vector.broadcast %cst_9 : f32 to vector<1x128xf32>
    %10 = arith.mulf %8, %9 : vector<1x128xf32>
    %11 = vector.extract_strided_slice %6 {offsets = [0, 0], sizes = [1, 16], strides = [1, 1]} : vector<1x128xf32> to vector<1x16xf32>
    %c0_10 = arith.constant 0 : index
    %c3 = arith.constant 3 : index
    %c3_11 = arith.constant 3 : index
    %12 = vector.load %arg7[%c0_10, %c3, %c3_11] : memref<2x14x22xf32, #tpu.memory_space<vmem>>, vector<1x1x16xf32>
    %13 = vector.shape_cast %12 : vector<1x1x16xf32> to vector<1x16xf32>
    %14 = vector.shape_cast %11 : vector<1x16xf32> to vector<1x1x16xf32>
    tpu.vector_store %arg7[%c0_10, %c3, %c3_11], %14 {strides = array<i32>} : memref<2x14x22xf32, #tpu.memory_space<vmem>>, vector<1x1x16xf32>,
    %15 = vector.extract_strided_slice %10 {offsets = [0, 0], sizes = [1, 16], strides = [1, 1]} : vector<1x128xf32> to vector<1x16xf32>
    %c1 = arith.constant 1 : index
    %c3_12 = arith.constant 3 : index
    %c3_13 = arith.constant 3 : index
    %16 = vector.load %arg7[%c1, %c3_12, %c3_13] : memref<2x14x22xf32, #tpu.memory_space<vmem>>, vector<1x1x16xf32>
    %17 = vector.shape_cast %16 : vector<1x1x16xf32> to vector<1x16xf32>
    %18 = vector.shape_cast %15 : vector<1x16xf32> to vector<1x1x16xf32>
    tpu.vector_store %arg7[%c1, %c3_12, %c3_13], %18 {strides = array<i32>} : memref<2x14x22xf32, #tpu.memory_space<vmem>>, vector<1x1x16xf32>,
    %19 = vector.extract_strided_slice %6 {offsets = [0, 16], sizes = [1, 16], strides = [1, 1]} : vector<1x128xf32> to vector<1x16xf32>
    %c0_14 = arith.constant 0 : index
    %c4 = arith.constant 4 : index
    %c3_15 = arith.constant 3 : index
    %20 = vector.load %arg7[%c0_14, %c4, %c3_15] : memref<2x14x22xf32, #tpu.memory_space<vmem>>, vector<1x1x16xf32>
    %21 = vector.shape_cast %20 : vector<1x1x16xf32> to vector<1x16xf32>
    %22 = vector.shape_cast %19 : vector<1x16xf32> to vector<1x1x16xf32>
    tpu.vector_store %arg7[%c0_14, %c4, %c3_15], %22 {strides = array<i32>} : memref<2x14x22xf32, #tpu.memory_space<vmem>>, vector<1x1x16xf32>,
    %23 = vector.extract_strided_slice %10 {offsets = [0, 16], sizes = [1, 16], strides = [1, 1]} : vector<1x128xf32> to vector<1x16xf32>
    %c1_16 = arith.constant 1 : index
    %c4_17 = arith.constant 4 : index
    %c3_18 = arith.constant 3 : index
    %24 = vector.load %arg7[%c1_16, %c4_17, %c3_18] : memref<2x14x22xf32, #tpu.memory_space<vmem>>, vector<1x1x16xf32>
    %25 = vector.shape_cast %24 : vector<1x1x16xf32> to vector<1x16xf32>
    %26 = vector.shape_cast %23 : vector<1x16xf32> to vector<1x1x16xf32>
    tpu.vector_store %arg7[%c1_16, %c4_17, %c3_18], %26 {strides = array<i32>} : memref<2x14x22xf32, #tpu.memory_space<vmem>>, vector<1x1x16xf32>,
    %27 = vector.extract_strided_slice %6 {offsets = [0, 32], sizes = [1, 16], strides = [1, 1]} : vector<1x128xf32> to vector<1x16xf32>
    %c0_19 = arith.constant 0 : index
    %c5 = arith.constant 5 : index
    %c3_20 = arith.constant 3 : index
    %28 = vector.load %arg7[%c0_19, %c5, %c3_20] : memref<2x14x22xf32, #tpu.memory_space<vmem>>, vector<1x1x16xf32>
    %29 = vector.shape_cast %28 : vector<1x1x16xf32> to vector<1x16xf32>
    %30 = vector.shape_cast %27 : vector<1x16xf32> to vector<1x1x16xf32>
    tpu.vector_store %arg7[%c0_19, %c5, %c3_20], %30 {strides = array<i32>} : memref<2x14x22xf32, #tpu.memory_space<vmem>>, vector<1x1x16xf32>,
    %31 = vector.extract_strided_slice %10 {offsets = [0, 32], sizes = [1, 16], strides = [1, 1]} : vector<1x128xf32> to vector<1x16xf32>
    %c1_21 = arith.constant 1 : index
    %c5_22 = arith.constant 5 : index
    %c3_23 = arith.constant 3 : index
    %32 = vector.load %arg7[%c1_21, %c5_22, %c3_23] : memref<2x14x22xf32, #tpu.memory_space<vmem>>, vector<1x1x16xf32>
    %33 = vector.shape_cast %32 : vector<1x1x16xf32> to vector<1x16xf32>
    %34 = vector.shape_cast %31 : vector<1x16xf32> to vector<1x1x16xf32>
    tpu.vector_store %arg7[%c1_21, %c5_22, %c3_23], %34 {strides = array<i32>} : memref<2x14x22xf32, #tpu.memory_space<vmem>>, vector<1x1x16xf32>,
    %35 = vector.extract_strided_slice %6 {offsets = [0, 48], sizes = [1, 16], strides = [1, 1]} : vector<1x128xf32> to vector<1x16xf32>
    %c0_24 = arith.constant 0 : index
    %c6 = arith.constant 6 : index
    %c3_25 = arith.constant 3 : index
    %36 = vector.load %arg7[%c0_24, %c6, %c3_25] : memref<2x14x22xf32, #tpu.memory_space<vmem>>, vector<1x1x16xf32>
    %37 = vector.shape_cast %36 : vector<1x1x16xf32> to vector<1x16xf32>
    %38 = vector.shape_cast %35 : vector<1x16xf32> to vector<1x1x16xf32>
    tpu.vector_store %arg7[%c0_24, %c6, %c3_25], %38 {strides = array<i32>} : memref<2x14x22xf32, #tpu.memory_space<vmem>>, vector<1x1x16xf32>,
    %39 = vector.extract_strided_slice %10 {offsets = [0, 48], sizes = [1, 16], strides = [1, 1]} : vector<1x128xf32> to vector<1x16xf32>
    %c1_26 = arith.constant 1 : index
    %c6_27 = arith.constant 6 : index
    %c3_28 = arith.constant 3 : index
    %40 = vector.load %arg7[%c1_26, %c6_27, %c3_28] : memref<2x14x22xf32, #tpu.memory_space<vmem>>, vector<1x1x16xf32>
    %41 = vector.shape_cast %40 : vector<1x1x16xf32> to vector<1x16xf32>
    %42 = vector.shape_cast %39 : vector<1x16xf32> to vector<1x1x16xf32>
    tpu.vector_store %arg7[%c1_26, %c6_27, %c3_28], %42 {strides = array<i32>} : memref<2x14x22xf32, #tpu.memory_space<vmem>>, vector<1x1x16xf32>,
    %43 = vector.extract_strided_slice %6 {offsets = [0, 64], sizes = [1, 16], strides = [1, 1]} : vector<1x128xf32> to vector<1x16xf32>
    %c0_29 = arith.constant 0 : index
    %c7 = arith.constant 7 : index
    %c3_30 = arith.constant 3 : index
    %44 = vector.load %arg7[%c0_29, %c7, %c3_30] : memref<2x14x22xf32, #tpu.memory_space<vmem>>, vector<1x1x16xf32>
    %45 = vector.shape_cast %44 : vector<1x1x16xf32> to vector<1x16xf32>
    %46 = vector.shape_cast %43 : vector<1x16xf32> to vector<1x1x16xf32>
    tpu.vector_store %arg7[%c0_29, %c7, %c3_30], %46 {strides = array<i32>} : memref<2x14x22xf32, #tpu.memory_space<vmem>>, vector<1x1x16xf32>,
    %47 = vector.extract_strided_slice %10 {offsets = [0, 64], sizes = [1, 16], strides = [1, 1]} : vector<1x128xf32> to vector<1x16xf32>
    %c1_31 = arith.constant 1 : index
    %c7_32 = arith.constant 7 : index
    %c3_33 = arith.constant 3 : index
    %48 = vector.load %arg7[%c1_31, %c7_32, %c3_33] : memref<2x14x22xf32, #tpu.memory_space<vmem>>, vector<1x1x16xf32>
    %49 = vector.shape_cast %48 : vector<1x1x16xf32> to vector<1x16xf32>
    %50 = vector.shape_cast %47 : vector<1x16xf32> to vector<1x1x16xf32>
    tpu.vector_store %arg7[%c1_31, %c7_32, %c3_33], %50 {strides = array<i32>} : memref<2x14x22xf32, #tpu.memory_space<vmem>>, vector<1x1x16xf32>,
    %51 = vector.extract_strided_slice %6 {offsets = [0, 80], sizes = [1, 16], strides = [1, 1]} : vector<1x128xf32> to vector<1x16xf32>
    %c0_34 = arith.constant 0 : index
    %c8 = arith.constant 8 : index
    %c3_35 = arith.constant 3 : index
    %52 = vector.load %arg7[%c0_34, %c8, %c3_35] : memref<2x14x22xf32, #tpu.memory_space<vmem>>, vector<1x1x16xf32>
    %53 = vector.shape_cast %52 : vector<1x1x16xf32> to vector<1x16xf32>
    %54 = vector.shape_cast %51 : vector<1x16xf32> to vector<1x1x16xf32>
    tpu.vector_store %arg7[%c0_34, %c8, %c3_35], %54 {strides = array<i32>} : memref<2x14x22xf32, #tpu.memory_space<vmem>>, vector<1x1x16xf32>,
    %55 = vector.extract_strided_slice %10 {offsets = [0, 80], sizes = [1, 16], strides = [1, 1]} : vector<1x128xf32> to vector<1x16xf32>
    %c1_36 = arith.constant 1 : index
    %c8_37 = arith.constant 8 : index
    %c3_38 = arith.constant 3 : index
    %56 = vector.load %arg7[%c1_36, %c8_37, %c3_38] : memref<2x14x22xf32, #tpu.memory_space<vmem>>, vector<1x1x16xf32>
    %57 = vector.shape_cast %56 : vector<1x1x16xf32> to vector<1x16xf32>
    %58 = vector.shape_cast %55 : vector<1x16xf32> to vector<1x1x16xf32>
    tpu.vector_store %arg7[%c1_36, %c8_37, %c3_38], %58 {strides = array<i32>} : memref<2x14x22xf32, #tpu.memory_space<vmem>>, vector<1x1x16xf32>,
    %59 = vector.extract_strided_slice %6 {offsets = [0, 96], sizes = [1, 16], strides = [1, 1]} : vector<1x128xf32> to vector<1x16xf32>
    %c0_39 = arith.constant 0 : index
    %c9 = arith.constant 9 : index
    %c3_40 = arith.constant 3 : index
    %60 = vector.load %arg7[%c0_39, %c9, %c3_40] : memref<2x14x22xf32, #tpu.memory_space<vmem>>, vector<1x1x16xf32>
    %61 = vector.shape_cast %60 : vector<1x1x16xf32> to vector<1x16xf32>
    %62 = vector.shape_cast %59 : vector<1x16xf32> to vector<1x1x16xf32>
    tpu.vector_store %arg7[%c0_39, %c9, %c3_40], %62 {strides = array<i32>} : memref<2x14x22xf32, #tpu.memory_space<vmem>>, vector<1x1x16xf32>,
    %63 = vector.extract_strided_slice %10 {offsets = [0, 96], sizes = [1, 16], strides = [1, 1]} : vector<1x128xf32> to vector<1x16xf32>
    %c1_41 = arith.constant 1 : index
    %c9_42 = arith.constant 9 : index
    %c3_43 = arith.constant 3 : index
    %64 = vector.load %arg7[%c1_41, %c9_42, %c3_43] : memref<2x14x22xf32, #tpu.memory_space<vmem>>, vector<1x1x16xf32>
    %65 = vector.shape_cast %64 : vector<1x1x16xf32> to vector<1x16xf32>
    %66 = vector.shape_cast %63 : vector<1x16xf32> to vector<1x1x16xf32>
    tpu.vector_store %arg7[%c1_41, %c9_42, %c3_43], %66 {strides = array<i32>} : memref<2x14x22xf32, #tpu.memory_space<vmem>>, vector<1x1x16xf32>,
    %67 = vector.extract_strided_slice %6 {offsets = [0, 112], sizes = [1, 16], strides = [1, 1]} : vector<1x128xf32> to vector<1x16xf32>
    %c0_44 = arith.constant 0 : index
    %c10 = arith.constant 10 : index
    %c3_45 = arith.constant 3 : index
    %68 = vector.load %arg7[%c0_44, %c10, %c3_45] : memref<2x14x22xf32, #tpu.memory_space<vmem>>, vector<1x1x16xf32>
    %69 = vector.shape_cast %68 : vector<1x1x16xf32> to vector<1x16xf32>
    %70 = vector.shape_cast %67 : vector<1x16xf32> to vector<1x1x16xf32>
    tpu.vector_store %arg7[%c0_44, %c10, %c3_45], %70 {strides = array<i32>} : memref<2x14x22xf32, #tpu.memory_space<vmem>>, vector<1x1x16xf32>,
    %71 = vector.extract_strided_slice %10 {offsets = [0, 112], sizes = [1, 16], strides = [1, 1]} : vector<1x128xf32> to vector<1x16xf32>
    %c1_46 = arith.constant 1 : index
    %c10_47 = arith.constant 10 : index
    %c3_48 = arith.constant 3 : index
    %72 = vector.load %arg7[%c1_46, %c10_47, %c3_48] : memref<2x14x22xf32, #tpu.memory_space<vmem>>, vector<1x1x16xf32>
    %73 = vector.shape_cast %72 : vector<1x1x16xf32> to vector<1x16xf32>
    %74 = vector.shape_cast %71 : vector<1x16xf32> to vector<1x1x16xf32>
    tpu.vector_store %arg7[%c1_46, %c10_47, %c3_48], %74 {strides = array<i32>} : memref<2x14x22xf32, #tpu.memory_space<vmem>>, vector<1x1x16xf32>,
    %c0_49 = arith.constant 0 : index
    %c0_50 = arith.constant 0 : index
    %c0_51 = arith.constant 0 : index
    %c0_52 = arith.constant 0 : index
    %75 = vector.load %arg3[%c0_49, %c0_50, %c0_51, %c0_52] : memref<1x2x6x16xf32, #tpu.memory_space<vmem>>, vector<1x2x6x16xf32>
    %76 = vector.shape_cast %75 : vector<1x2x6x16xf32> to vector<2x6x16xf32>
    %77 = vector.extract_strided_slice %76 {offsets = [0, 0, 0], sizes = [1, 3, 16], strides = [1, 1, 1]} : vector<2x6x16xf32> to vector<1x3x16xf32>
    %78 = vector.shape_cast %77 : vector<1x3x16xf32> to vector<3x16xf32>
    %c0_53 = arith.constant 0 : index
    %c0_54 = arith.constant 0 : index
    %c3_55 = arith.constant 3 : index
    %79 = vector.load %arg7[%c0_53, %c0_54, %c3_55] : memref<2x14x22xf32, #tpu.memory_space<vmem>>, vector<1x3x16xf32>
    %80 = vector.shape_cast %79 : vector<1x3x16xf32> to vector<3x16xf32>
    %81 = vector.shape_cast %78 : vector<3x16xf32> to vector<1x3x16xf32>
    tpu.vector_store %arg7[%c0_53, %c0_54, %c3_55], %81 {strides = array<i32>} : memref<2x14x22xf32, #tpu.memory_space<vmem>>, vector<1x3x16xf32>,
    %82 = vector.extract_strided_slice %76 {offsets = [0, 3, 0], sizes = [1, 3, 16], strides = [1, 1, 1]} : vector<2x6x16xf32> to vector<1x3x16xf32>
    %83 = vector.shape_cast %82 : vector<1x3x16xf32> to vector<3x16xf32>
    %c0_56 = arith.constant 0 : index
    %c11 = arith.constant 11 : index
    %c3_57 = arith.constant 3 : index
    %84 = vector.load %arg7[%c0_56, %c11, %c3_57] : memref<2x14x22xf32, #tpu.memory_space<vmem>>, vector<1x3x16xf32>
    %85 = vector.shape_cast %84 : vector<1x3x16xf32> to vector<3x16xf32>
    %86 = vector.shape_cast %83 : vector<3x16xf32> to vector<1x3x16xf32>
    tpu.vector_store %arg7[%c0_56, %c11, %c3_57], %86 {strides = array<i32>} : memref<2x14x22xf32, #tpu.memory_space<vmem>>, vector<1x3x16xf32>,
    %87 = vector.extract_strided_slice %76 {offsets = [1, 0, 0], sizes = [1, 3, 16], strides = [1, 1, 1]} : vector<2x6x16xf32> to vector<1x3x16xf32>
    %88 = vector.shape_cast %87 : vector<1x3x16xf32> to vector<3x16xf32>
    %c1_58 = arith.constant 1 : index
    %c0_59 = arith.constant 0 : index
    %c3_60 = arith.constant 3 : index
    %89 = vector.load %arg7[%c1_58, %c0_59, %c3_60] : memref<2x14x22xf32, #tpu.memory_space<vmem>>, vector<1x3x16xf32>
    %90 = vector.shape_cast %89 : vector<1x3x16xf32> to vector<3x16xf32>
    %91 = vector.shape_cast %88 : vector<3x16xf32> to vector<1x3x16xf32>
    tpu.vector_store %arg7[%c1_58, %c0_59, %c3_60], %91 {strides = array<i32>} : memref<2x14x22xf32, #tpu.memory_space<vmem>>, vector<1x3x16xf32>,
    %92 = vector.extract_strided_slice %76 {offsets = [1, 3, 0], sizes = [1, 3, 16], strides = [1, 1, 1]} : vector<2x6x16xf32> to vector<1x3x16xf32>
    %93 = vector.shape_cast %92 : vector<1x3x16xf32> to vector<3x16xf32>
    %c1_61 = arith.constant 1 : index
    %c11_62 = arith.constant 11 : index
    %c3_63 = arith.constant 3 : index
    %94 = vector.load %arg7[%c1_61, %c11_62, %c3_63] : memref<2x14x22xf32, #tpu.memory_space<vmem>>, vector<1x3x16xf32>
    %95 = vector.shape_cast %94 : vector<1x3x16xf32> to vector<3x16xf32>
    %96 = vector.shape_cast %93 : vector<3x16xf32> to vector<1x3x16xf32>
    tpu.vector_store %arg7[%c1_61, %c11_62, %c3_63], %96 {strides = array<i32>} : memref<2x14x22xf32, #tpu.memory_space<vmem>>, vector<1x3x16xf32>,
    %cst_64 = arith.constant 0.000000e+00 : f32
    %97 = vector.broadcast %cst_64 : f32 to vector<8x16xf32>
    %cst_65 = arith.constant 0.000000e+00 : f32
    %98 = vector.broadcast %cst_65 : f32 to vector<8x16xf32>
    %cst_66 = arith.constant 0.000000e+00 : f32
    %99 = vector.broadcast %cst_66 : f32 to vector<8x16xf32>
    %cst_67 = arith.constant 0.000000e+00 : f32
    %100 = vector.broadcast %cst_67 : f32 to vector<8x16xf32>
    %c0_68 = arith.constant 0 : index
    %c0_69 = arith.constant 0 : index
    %c0_70 = arith.constant 0 : index
    %101 = vector.load %arg7[%c0_68, %c0_69, %c0_70] : memref<2x14x22xf32, #tpu.memory_space<vmem>>, vector<1x14x16xf32>
    %102 = vector.shape_cast %101 : vector<1x14x16xf32> to vector<14x16xf32>
    %c0_71 = arith.constant 0 : index
    %103 = memref.load %arg4[%c0_71] : memref<98xf32, #tpu.memory_space<smem>>
    %104 = vector.extract_strided_slice %102 {offsets = [0, 0], sizes = [8, 16], strides = [1, 1]} : vector<14x16xf32> to vector<8x16xf32>
    %105 = vector.broadcast %103 : f32 to vector<8x16xf32>
    %106 = arith.mulf %105, %104 : vector<8x16xf32>
    %107 = arith.addf %97, %106 : vector<8x16xf32>
    %c7_72 = arith.constant 7 : index
    %108 = memref.load %arg4[%c7_72] : memref<98xf32, #tpu.memory_space<smem>>
    %109 = vector.extract_strided_slice %102 {offsets = [1, 0], sizes = [8, 16], strides = [1, 1]} : vector<14x16xf32> to vector<8x16xf32>
    %110 = vector.broadcast %108 : f32 to vector<8x16xf32>
    %111 = arith.mulf %110, %109 : vector<8x16xf32>
    %112 = arith.addf %98, %111 : vector<8x16xf32>
    %c14 = arith.constant 14 : index
    %113 = memref.load %arg4[%c14] : memref<98xf32, #tpu.memory_space<smem>>
    %114 = vector.extract_strided_slice %102 {offsets = [2, 0], sizes = [8, 16], strides = [1, 1]} : vector<14x16xf32> to vector<8x16xf32>
    %115 = vector.broadcast %113 : f32 to vector<8x16xf32>
    %116 = arith.mulf %115, %114 : vector<8x16xf32>
    %117 = arith.addf %99, %116 : vector<8x16xf32>
    %c21 = arith.constant 21 : index
    %118 = memref.load %arg4[%c21] : memref<98xf32, #tpu.memory_space<smem>>
    %119 = vector.extract_strided_slice %102 {offsets = [3, 0], sizes = [8, 16], strides = [1, 1]} : vector<14x16xf32> to vector<8x16xf32>
    %120 = vector.broadcast %118 : f32 to vector<8x16xf32>
    %121 = arith.mulf %120, %119 : vector<8x16xf32>
    %122 = arith.addf %100, %121 : vector<8x16xf32>
    %c28 = arith.constant 28 : index
    %123 = memref.load %arg4[%c28] : memref<98xf32, #tpu.memory_space<smem>>
    %124 = vector.extract_strided_slice %102 {offsets = [4, 0], sizes = [8, 16], strides = [1, 1]} : vector<14x16xf32> to vector<8x16xf32>
    %125 = vector.broadcast %123 : f32 to vector<8x16xf32>
    %126 = arith.mulf %125, %124 : vector<8x16xf32>
    %127 = arith.addf %107, %126 : vector<8x16xf32>
    %c35 = arith.constant 35 : index
    %128 = memref.load %arg4[%c35] : memref<98xf32, #tpu.memory_space<smem>>
    %129 = vector.extract_strided_slice %102 {offsets = [5, 0], sizes = [8, 16], strides = [1, 1]} : vector<14x16xf32> to vector<8x16xf32>
    %130 = vector.broadcast %128 : f32 to vector<8x16xf32>
    %131 = arith.mulf %130, %129 : vector<8x16xf32>
    %132 = arith.addf %112, %131 : vector<8x16xf32>
    %c42 = arith.constant 42 : index
    %133 = memref.load %arg4[%c42] : memref<98xf32, #tpu.memory_space<smem>>
    %134 = vector.extract_strided_slice %102 {offsets = [6, 0], sizes = [8, 16], strides = [1, 1]} : vector<14x16xf32> to vector<8x16xf32>
    %135 = vector.broadcast %133 : f32 to vector<8x16xf32>
    %136 = arith.mulf %135, %134 : vector<8x16xf32>
    %137 = arith.addf %117, %136 : vector<8x16xf32>
    %c0_73 = arith.constant 0 : index
    %c0_74 = arith.constant 0 : index
    %c1_75 = arith.constant 1 : index
    %138 = vector.load %arg7[%c0_73, %c0_74, %c1_75] : memref<2x14x22xf32, #tpu.memory_space<vmem>>, vector<1x14x16xf32>
    %139 = vector.shape_cast %138 : vector<1x14x16xf32> to vector<14x16xf32>
    %c1_76 = arith.constant 1 : index
    %140 = memref.load %arg4[%c1_76] : memref<98xf32, #tpu.memory_space<smem>>
    %141 = vector.extract_strided_slice %139 {offsets = [0, 0], sizes = [8, 16], strides = [1, 1]} : vector<14x16xf32> to vector<8x16xf32>
    %142 = vector.broadcast %140 : f32 to vector<8x16xf32>
    %143 = arith.mulf %142, %141 : vector<8x16xf32>
    %144 = arith.addf %122, %143 : vector<8x16xf32>
    %c8_77 = arith.constant 8 : index
    %145 = memref.load %arg4[%c8_77] : memref<98xf32, #tpu.memory_space<smem>>
    %146 = vector.extract_strided_slice %139 {offsets = [1, 0], sizes = [8, 16], strides = [1, 1]} : vector<14x16xf32> to vector<8x16xf32>
    %147 = vector.broadcast %145 : f32 to vector<8x16xf32>
    %148 = arith.mulf %147, %146 : vector<8x16xf32>
    %149 = arith.addf %127, %148 : vector<8x16xf32>
    %c15 = arith.constant 15 : index
    %150 = memref.load %arg4[%c15] : memref<98xf32, #tpu.memory_space<smem>>
    %151 = vector.extract_strided_slice %139 {offsets = [2, 0], sizes = [8, 16], strides = [1, 1]} : vector<14x16xf32> to vector<8x16xf32>
    %152 = vector.broadcast %150 : f32 to vector<8x16xf32>
    %153 = arith.mulf %152, %151 : vector<8x16xf32>
    %154 = arith.addf %132, %153 : vector<8x16xf32>
    %c22 = arith.constant 22 : index
    %155 = memref.load %arg4[%c22] : memref<98xf32, #tpu.memory_space<smem>>
    %156 = vector.extract_strided_slice %139 {offsets = [3, 0], sizes = [8, 16], strides = [1, 1]} : vector<14x16xf32> to vector<8x16xf32>
    %157 = vector.broadcast %155 : f32 to vector<8x16xf32>
    %158 = arith.mulf %157, %156 : vector<8x16xf32>
    %159 = arith.addf %137, %158 : vector<8x16xf32>
    %c29 = arith.constant 29 : index
    %160 = memref.load %arg4[%c29] : memref<98xf32, #tpu.memory_space<smem>>
    %161 = vector.extract_strided_slice %139 {offsets = [4, 0], sizes = [8, 16], strides = [1, 1]} : vector<14x16xf32> to vector<8x16xf32>
    %162 = vector.broadcast %160 : f32 to vector<8x16xf32>
    %163 = arith.mulf %162, %161 : vector<8x16xf32>
    %164 = arith.addf %144, %163 : vector<8x16xf32>
    %c36 = arith.constant 36 : index
    %165 = memref.load %arg4[%c36] : memref<98xf32, #tpu.memory_space<smem>>
    %166 = vector.extract_strided_slice %139 {offsets = [5, 0], sizes = [8, 16], strides = [1, 1]} : vector<14x16xf32> to vector<8x16xf32>
    %167 = vector.broadcast %165 : f32 to vector<8x16xf32>
    %168 = arith.mulf %167, %166 : vector<8x16xf32>
    %169 = arith.addf %149, %168 : vector<8x16xf32>
    %c43 = arith.constant 43 : index
    %170 = memref.load %arg4[%c43] : memref<98xf32, #tpu.memory_space<smem>>
    %171 = vector.extract_strided_slice %139 {offsets = [6, 0], sizes = [8, 16], strides = [1, 1]} : vector<14x16xf32> to vector<8x16xf32>
    %172 = vector.broadcast %170 : f32 to vector<8x16xf32>
    %173 = arith.mulf %172, %171 : vector<8x16xf32>
    %174 = arith.addf %154, %173 : vector<8x16xf32>
    %c0_78 = arith.constant 0 : index
    %c0_79 = arith.constant 0 : index
    %c2 = arith.constant 2 : index
    %175 = vector.load %arg7[%c0_78, %c0_79, %c2] : memref<2x14x22xf32, #tpu.memory_space<vmem>>, vector<1x14x16xf32>
    %176 = vector.shape_cast %175 : vector<1x14x16xf32> to vector<14x16xf32>
    %c2_80 = arith.constant 2 : index
    %177 = memref.load %arg4[%c2_80] : memref<98xf32, #tpu.memory_space<smem>>
    %178 = vector.extract_strided_slice %176 {offsets = [0, 0], sizes = [8, 16], strides = [1, 1]} : vector<14x16xf32> to vector<8x16xf32>
    %179 = vector.broadcast %177 : f32 to vector<8x16xf32>
    %180 = arith.mulf %179, %178 : vector<8x16xf32>
    %181 = arith.addf %159, %180 : vector<8x16xf32>
    %c9_81 = arith.constant 9 : index
    %182 = memref.load %arg4[%c9_81] : memref<98xf32, #tpu.memory_space<smem>>
    %183 = vector.extract_strided_slice %176 {offsets = [1, 0], sizes = [8, 16], strides = [1, 1]} : vector<14x16xf32> to vector<8x16xf32>
    %184 = vector.broadcast %182 : f32 to vector<8x16xf32>
    %185 = arith.mulf %184, %183 : vector<8x16xf32>
    %186 = arith.addf %164, %185 : vector<8x16xf32>
    %c16 = arith.constant 16 : index
    %187 = memref.load %arg4[%c16] : memref<98xf32, #tpu.memory_space<smem>>
    %188 = vector.extract_strided_slice %176 {offsets = [2, 0], sizes = [8, 16], strides = [1, 1]} : vector<14x16xf32> to vector<8x16xf32>
    %189 = vector.broadcast %187 : f32 to vector<8x16xf32>
    %190 = arith.mulf %189, %188 : vector<8x16xf32>
    %191 = arith.addf %169, %190 : vector<8x16xf32>
    %c23 = arith.constant 23 : index
    %192 = memref.load %arg4[%c23] : memref<98xf32, #tpu.memory_space<smem>>
    %193 = vector.extract_strided_slice %176 {offsets = [3, 0], sizes = [8, 16], strides = [1, 1]} : vector<14x16xf32> to vector<8x16xf32>
    %194 = vector.broadcast %192 : f32 to vector<8x16xf32>
    %195 = arith.mulf %194, %193 : vector<8x16xf32>
    %196 = arith.addf %174, %195 : vector<8x16xf32>
    %c30 = arith.constant 30 : index
    %197 = memref.load %arg4[%c30] : memref<98xf32, #tpu.memory_space<smem>>
    %198 = vector.extract_strided_slice %176 {offsets = [4, 0], sizes = [8, 16], strides = [1, 1]} : vector<14x16xf32> to vector<8x16xf32>
    %199 = vector.broadcast %197 : f32 to vector<8x16xf32>
    %200 = arith.mulf %199, %198 : vector<8x16xf32>
    %201 = arith.addf %181, %200 : vector<8x16xf32>
    %c37 = arith.constant 37 : index
    %202 = memref.load %arg4[%c37] : memref<98xf32, #tpu.memory_space<smem>>
    %203 = vector.extract_strided_slice %176 {offsets = [5, 0], sizes = [8, 16], strides = [1, 1]} : vector<14x16xf32> to vector<8x16xf32>
    %204 = vector.broadcast %202 : f32 to vector<8x16xf32>
    %205 = arith.mulf %204, %203 : vector<8x16xf32>
    %206 = arith.addf %186, %205 : vector<8x16xf32>
    %c44 = arith.constant 44 : index
    %207 = memref.load %arg4[%c44] : memref<98xf32, #tpu.memory_space<smem>>
    %208 = vector.extract_strided_slice %176 {offsets = [6, 0], sizes = [8, 16], strides = [1, 1]} : vector<14x16xf32> to vector<8x16xf32>
    %209 = vector.broadcast %207 : f32 to vector<8x16xf32>
    %210 = arith.mulf %209, %208 : vector<8x16xf32>
    %211 = arith.addf %191, %210 : vector<8x16xf32>
    %c0_82 = arith.constant 0 : index
    %c0_83 = arith.constant 0 : index
    %c3_84 = arith.constant 3 : index
    %212 = vector.load %arg7[%c0_82, %c0_83, %c3_84] : memref<2x14x22xf32, #tpu.memory_space<vmem>>, vector<1x14x16xf32>
    %213 = vector.shape_cast %212 : vector<1x14x16xf32> to vector<14x16xf32>
    %c3_85 = arith.constant 3 : index
    %214 = memref.load %arg4[%c3_85] : memref<98xf32, #tpu.memory_space<smem>>
    %215 = vector.extract_strided_slice %213 {offsets = [0, 0], sizes = [8, 16], strides = [1, 1]} : vector<14x16xf32> to vector<8x16xf32>
    %216 = vector.broadcast %214 : f32 to vector<8x16xf32>
    %217 = arith.mulf %216, %215 : vector<8x16xf32>
    %218 = arith.addf %196, %217 : vector<8x16xf32>
    %c10_86 = arith.constant 10 : index
    %219 = memref.load %arg4[%c10_86] : memref<98xf32, #tpu.memory_space<smem>>
    %220 = vector.extract_strided_slice %213 {offsets = [1, 0], sizes = [8, 16], strides = [1, 1]} : vector<14x16xf32> to vector<8x16xf32>
    %221 = vector.broadcast %219 : f32 to vector<8x16xf32>
    %222 = arith.mulf %221, %220 : vector<8x16xf32>
    %223 = arith.addf %201, %222 : vector<8x16xf32>
    %c17 = arith.constant 17 : index
    %224 = memref.load %arg4[%c17] : memref<98xf32, #tpu.memory_space<smem>>
    %225 = vector.extract_strided_slice %213 {offsets = [2, 0], sizes = [8, 16], strides = [1, 1]} : vector<14x16xf32> to vector<8x16xf32>
    %226 = vector.broadcast %224 : f32 to vector<8x16xf32>
    %227 = arith.mulf %226, %225 : vector<8x16xf32>
    %228 = arith.addf %206, %227 : vector<8x16xf32>
    %c24 = arith.constant 24 : index
    %229 = memref.load %arg4[%c24] : memref<98xf32, #tpu.memory_space<smem>>
    %230 = vector.extract_strided_slice %213 {offsets = [3, 0], sizes = [8, 16], strides = [1, 1]} : vector<14x16xf32> to vector<8x16xf32>
    %231 = vector.broadcast %229 : f32 to vector<8x16xf32>
    %232 = arith.mulf %231, %230 : vector<8x16xf32>
    %233 = arith.addf %211, %232 : vector<8x16xf32>
    %c31 = arith.constant 31 : index
    %234 = memref.load %arg4[%c31] : memref<98xf32, #tpu.memory_space<smem>>
    %235 = vector.extract_strided_slice %213 {offsets = [4, 0], sizes = [8, 16], strides = [1, 1]} : vector<14x16xf32> to vector<8x16xf32>
    %236 = vector.broadcast %234 : f32 to vector<8x16xf32>
    %237 = arith.mulf %236, %235 : vector<8x16xf32>
    %238 = arith.addf %218, %237 : vector<8x16xf32>
    %c38 = arith.constant 38 : index
    %239 = memref.load %arg4[%c38] : memref<98xf32, #tpu.memory_space<smem>>
    %240 = vector.extract_strided_slice %213 {offsets = [5, 0], sizes = [8, 16], strides = [1, 1]} : vector<14x16xf32> to vector<8x16xf32>
    %241 = vector.broadcast %239 : f32 to vector<8x16xf32>
    %242 = arith.mulf %241, %240 : vector<8x16xf32>
    %243 = arith.addf %223, %242 : vector<8x16xf32>
    %c45 = arith.constant 45 : index
    %244 = memref.load %arg4[%c45] : memref<98xf32, #tpu.memory_space<smem>>
    %245 = vector.extract_strided_slice %213 {offsets = [6, 0], sizes = [8, 16], strides = [1, 1]} : vector<14x16xf32> to vector<8x16xf32>
    %246 = vector.broadcast %244 : f32 to vector<8x16xf32>
    %247 = arith.mulf %246, %245 : vector<8x16xf32>
    %248 = arith.addf %228, %247 : vector<8x16xf32>
    %c0_87 = arith.constant 0 : index
    %c0_88 = arith.constant 0 : index
    %c4_89 = arith.constant 4 : index
    %249 = vector.load %arg7[%c0_87, %c0_88, %c4_89] : memref<2x14x22xf32, #tpu.memory_space<vmem>>, vector<1x14x16xf32>
    %250 = vector.shape_cast %249 : vector<1x14x16xf32> to vector<14x16xf32>
    %c4_90 = arith.constant 4 : index
    %251 = memref.load %arg4[%c4_90] : memref<98xf32, #tpu.memory_space<smem>>
    %252 = vector.extract_strided_slice %250 {offsets = [0, 0], sizes = [8, 16], strides = [1, 1]} : vector<14x16xf32> to vector<8x16xf32>
    %253 = vector.broadcast %251 : f32 to vector<8x16xf32>
    %254 = arith.mulf %253, %252 : vector<8x16xf32>
    %255 = arith.addf %233, %254 : vector<8x16xf32>
    %c11_91 = arith.constant 11 : index
    %256 = memref.load %arg4[%c11_91] : memref<98xf32, #tpu.memory_space<smem>>
    %257 = vector.extract_strided_slice %250 {offsets = [1, 0], sizes = [8, 16], strides = [1, 1]} : vector<14x16xf32> to vector<8x16xf32>
    %258 = vector.broadcast %256 : f32 to vector<8x16xf32>
    %259 = arith.mulf %258, %257 : vector<8x16xf32>
    %260 = arith.addf %238, %259 : vector<8x16xf32>
    %c18 = arith.constant 18 : index
    %261 = memref.load %arg4[%c18] : memref<98xf32, #tpu.memory_space<smem>>
    %262 = vector.extract_strided_slice %250 {offsets = [2, 0], sizes = [8, 16], strides = [1, 1]} : vector<14x16xf32> to vector<8x16xf32>
    %263 = vector.broadcast %261 : f32 to vector<8x16xf32>
    %264 = arith.mulf %263, %262 : vector<8x16xf32>
    %265 = arith.addf %243, %264 : vector<8x16xf32>
    %c25 = arith.constant 25 : index
    %266 = memref.load %arg4[%c25] : memref<98xf32, #tpu.memory_space<smem>>
    %267 = vector.extract_strided_slice %250 {offsets = [3, 0], sizes = [8, 16], strides = [1, 1]} : vector<14x16xf32> to vector<8x16xf32>
    %268 = vector.broadcast %266 : f32 to vector<8x16xf32>
    %269 = arith.mulf %268, %267 : vector<8x16xf32>
    %270 = arith.addf %248, %269 : vector<8x16xf32>
    %c32 = arith.constant 32 : index
    %271 = memref.load %arg4[%c32] : memref<98xf32, #tpu.memory_space<smem>>
    %272 = vector.extract_strided_slice %250 {offsets = [4, 0], sizes = [8, 16], strides = [1, 1]} : vector<14x16xf32> to vector<8x16xf32>
    %273 = vector.broadcast %271 : f32 to vector<8x16xf32>
    %274 = arith.mulf %273, %272 : vector<8x16xf32>
    %275 = arith.addf %255, %274 : vector<8x16xf32>
    %c39 = arith.constant 39 : index
    %276 = memref.load %arg4[%c39] : memref<98xf32, #tpu.memory_space<smem>>
    %277 = vector.extract_strided_slice %250 {offsets = [5, 0], sizes = [8, 16], strides = [1, 1]} : vector<14x16xf32> to vector<8x16xf32>
    %278 = vector.broadcast %276 : f32 to vector<8x16xf32>
    %279 = arith.mulf %278, %277 : vector<8x16xf32>
    %280 = arith.addf %260, %279 : vector<8x16xf32>
    %c46 = arith.constant 46 : index
    %281 = memref.load %arg4[%c46] : memref<98xf32, #tpu.memory_space<smem>>
    %282 = vector.extract_strided_slice %250 {offsets = [6, 0], sizes = [8, 16], strides = [1, 1]} : vector<14x16xf32> to vector<8x16xf32>
    %283 = vector.broadcast %281 : f32 to vector<8x16xf32>
    %284 = arith.mulf %283, %282 : vector<8x16xf32>
    %285 = arith.addf %265, %284 : vector<8x16xf32>
    %c0_92 = arith.constant 0 : index
    %c0_93 = arith.constant 0 : index
    %c5_94 = arith.constant 5 : index
    %286 = vector.load %arg7[%c0_92, %c0_93, %c5_94] : memref<2x14x22xf32, #tpu.memory_space<vmem>>, vector<1x14x16xf32>
    %287 = vector.shape_cast %286 : vector<1x14x16xf32> to vector<14x16xf32>
    %c5_95 = arith.constant 5 : index
    %288 = memref.load %arg4[%c5_95] : memref<98xf32, #tpu.memory_space<smem>>
    %289 = vector.extract_strided_slice %287 {offsets = [0, 0], sizes = [8, 16], strides = [1, 1]} : vector<14x16xf32> to vector<8x16xf32>
    %290 = vector.broadcast %288 : f32 to vector<8x16xf32>
    %291 = arith.mulf %290, %289 : vector<8x16xf32>
    %292 = arith.addf %270, %291 : vector<8x16xf32>
    %c12 = arith.constant 12 : index
    %293 = memref.load %arg4[%c12] : memref<98xf32, #tpu.memory_space<smem>>
    %294 = vector.extract_strided_slice %287 {offsets = [1, 0], sizes = [8, 16], strides = [1, 1]} : vector<14x16xf32> to vector<8x16xf32>
    %295 = vector.broadcast %293 : f32 to vector<8x16xf32>
    %296 = arith.mulf %295, %294 : vector<8x16xf32>
    %297 = arith.addf %275, %296 : vector<8x16xf32>
    %c19_96 = arith.constant 19 : index
    %298 = memref.load %arg4[%c19_96] : memref<98xf32, #tpu.memory_space<smem>>
    %299 = vector.extract_strided_slice %287 {offsets = [2, 0], sizes = [8, 16], strides = [1, 1]} : vector<14x16xf32> to vector<8x16xf32>
    %300 = vector.broadcast %298 : f32 to vector<8x16xf32>
    %301 = arith.mulf %300, %299 : vector<8x16xf32>
    %302 = arith.addf %280, %301 : vector<8x16xf32>
    %c26 = arith.constant 26 : index
    %303 = memref.load %arg4[%c26] : memref<98xf32, #tpu.memory_space<smem>>
    %304 = vector.extract_strided_slice %287 {offsets = [3, 0], sizes = [8, 16], strides = [1, 1]} : vector<14x16xf32> to vector<8x16xf32>
    %305 = vector.broadcast %303 : f32 to vector<8x16xf32>
    %306 = arith.mulf %305, %304 : vector<8x16xf32>
    %307 = arith.addf %285, %306 : vector<8x16xf32>
    %c33 = arith.constant 33 : index
    %308 = memref.load %arg4[%c33] : memref<98xf32, #tpu.memory_space<smem>>
    %309 = vector.extract_strided_slice %287 {offsets = [4, 0], sizes = [8, 16], strides = [1, 1]} : vector<14x16xf32> to vector<8x16xf32>
    %310 = vector.broadcast %308 : f32 to vector<8x16xf32>
    %311 = arith.mulf %310, %309 : vector<8x16xf32>
    %312 = arith.addf %292, %311 : vector<8x16xf32>
    %c40 = arith.constant 40 : index
    %313 = memref.load %arg4[%c40] : memref<98xf32, #tpu.memory_space<smem>>
    %314 = vector.extract_strided_slice %287 {offsets = [5, 0], sizes = [8, 16], strides = [1, 1]} : vector<14x16xf32> to vector<8x16xf32>
    %315 = vector.broadcast %313 : f32 to vector<8x16xf32>
    %316 = arith.mulf %315, %314 : vector<8x16xf32>
    %317 = arith.addf %297, %316 : vector<8x16xf32>
    %c47 = arith.constant 47 : index
    %318 = memref.load %arg4[%c47] : memref<98xf32, #tpu.memory_space<smem>>
    %319 = vector.extract_strided_slice %287 {offsets = [6, 0], sizes = [8, 16], strides = [1, 1]} : vector<14x16xf32> to vector<8x16xf32>
    %320 = vector.broadcast %318 : f32 to vector<8x16xf32>
    %321 = arith.mulf %320, %319 : vector<8x16xf32>
    %322 = arith.addf %302, %321 : vector<8x16xf32>
    %c0_97 = arith.constant 0 : index
    %c0_98 = arith.constant 0 : index
    %c6_99 = arith.constant 6 : index
    %323 = vector.load %arg7[%c0_97, %c0_98, %c6_99] : memref<2x14x22xf32, #tpu.memory_space<vmem>>, vector<1x14x16xf32>
    %324 = vector.shape_cast %323 : vector<1x14x16xf32> to vector<14x16xf32>
    %c6_100 = arith.constant 6 : index
    %325 = memref.load %arg4[%c6_100] : memref<98xf32, #tpu.memory_space<smem>>
    %326 = vector.extract_strided_slice %324 {offsets = [0, 0], sizes = [8, 16], strides = [1, 1]} : vector<14x16xf32> to vector<8x16xf32>
    %327 = vector.broadcast %325 : f32 to vector<8x16xf32>
    %328 = arith.mulf %327, %326 : vector<8x16xf32>
    %329 = arith.addf %307, %328 : vector<8x16xf32>
    %c13 = arith.constant 13 : index
    %330 = memref.load %arg4[%c13] : memref<98xf32, #tpu.memory_space<smem>>
    %331 = vector.extract_strided_slice %324 {offsets = [1, 0], sizes = [8, 16], strides = [1, 1]} : vector<14x16xf32> to vector<8x16xf32>
    %332 = vector.broadcast %330 : f32 to vector<8x16xf32>
    %333 = arith.mulf %332, %331 : vector<8x16xf32>
    %334 = arith.addf %312, %333 : vector<8x16xf32>
    %c20 = arith.constant 20 : index
    %335 = memref.load %arg4[%c20] : memref<98xf32, #tpu.memory_space<smem>>
    %336 = vector.extract_strided_slice %324 {offsets = [2, 0], sizes = [8, 16], strides = [1, 1]} : vector<14x16xf32> to vector<8x16xf32>
    %337 = vector.broadcast %335 : f32 to vector<8x16xf32>
    %338 = arith.mulf %337, %336 : vector<8x16xf32>
    %339 = arith.addf %317, %338 : vector<8x16xf32>
    %c27 = arith.constant 27 : index
    %340 = memref.load %arg4[%c27] : memref<98xf32, #tpu.memory_space<smem>>
    %341 = vector.extract_strided_slice %324 {offsets = [3, 0], sizes = [8, 16], strides = [1, 1]} : vector<14x16xf32> to vector<8x16xf32>
    %342 = vector.broadcast %340 : f32 to vector<8x16xf32>
    %343 = arith.mulf %342, %341 : vector<8x16xf32>
    %344 = arith.addf %322, %343 : vector<8x16xf32>
    %c34 = arith.constant 34 : index
    %345 = memref.load %arg4[%c34] : memref<98xf32, #tpu.memory_space<smem>>
    %346 = vector.extract_strided_slice %324 {offsets = [4, 0], sizes = [8, 16], strides = [1, 1]} : vector<14x16xf32> to vector<8x16xf32>
    %347 = vector.broadcast %345 : f32 to vector<8x16xf32>
    %348 = arith.mulf %347, %346 : vector<8x16xf32>
    %349 = arith.addf %329, %348 : vector<8x16xf32>
    %c41 = arith.constant 41 : index
    %350 = memref.load %arg4[%c41] : memref<98xf32, #tpu.memory_space<smem>>
    %351 = vector.extract_strided_slice %324 {offsets = [5, 0], sizes = [8, 16], strides = [1, 1]} : vector<14x16xf32> to vector<8x16xf32>
    %352 = vector.broadcast %350 : f32 to vector<8x16xf32>
    %353 = arith.mulf %352, %351 : vector<8x16xf32>
    %354 = arith.addf %334, %353 : vector<8x16xf32>
    %c48 = arith.constant 48 : index
    %355 = memref.load %arg4[%c48] : memref<98xf32, #tpu.memory_space<smem>>
    %356 = vector.extract_strided_slice %324 {offsets = [6, 0], sizes = [8, 16], strides = [1, 1]} : vector<14x16xf32> to vector<8x16xf32>
    %357 = vector.broadcast %355 : f32 to vector<8x16xf32>
    %358 = arith.mulf %357, %356 : vector<8x16xf32>
    %359 = arith.addf %339, %358 : vector<8x16xf32>
    %c1_101 = arith.constant 1 : index
    %c0_102 = arith.constant 0 : index
    %c0_103 = arith.constant 0 : index
    %360 = vector.load %arg7[%c1_101, %c0_102, %c0_103] : memref<2x14x22xf32, #tpu.memory_space<vmem>>, vector<1x14x16xf32>
    %361 = vector.shape_cast %360 : vector<1x14x16xf32> to vector<14x16xf32>
    %c49 = arith.constant 49 : index
    %362 = memref.load %arg4[%c49] : memref<98xf32, #tpu.memory_space<smem>>
    %363 = vector.extract_strided_slice %361 {offsets = [0, 0], sizes = [8, 16], strides = [1, 1]} : vector<14x16xf32> to vector<8x16xf32>
    %364 = vector.broadcast %362 : f32 to vector<8x16xf32>
    %365 = arith.mulf %364, %363 : vector<8x16xf32>
    %366 = arith.addf %344, %365 : vector<8x16xf32>
    %c56 = arith.constant 56 : index
    %367 = memref.load %arg4[%c56] : memref<98xf32, #tpu.memory_space<smem>>
    %368 = vector.extract_strided_slice %361 {offsets = [1, 0], sizes = [8, 16], strides = [1, 1]} : vector<14x16xf32> to vector<8x16xf32>
    %369 = vector.broadcast %367 : f32 to vector<8x16xf32>
    %370 = arith.mulf %369, %368 : vector<8x16xf32>
    %371 = arith.addf %349, %370 : vector<8x16xf32>
    %c63 = arith.constant 63 : index
    %372 = memref.load %arg4[%c63] : memref<98xf32, #tpu.memory_space<smem>>
    %373 = vector.extract_strided_slice %361 {offsets = [2, 0], sizes = [8, 16], strides = [1, 1]} : vector<14x16xf32> to vector<8x16xf32>
    %374 = vector.broadcast %372 : f32 to vector<8x16xf32>
    %375 = arith.mulf %374, %373 : vector<8x16xf32>
    %376 = arith.addf %354, %375 : vector<8x16xf32>
    %c70 = arith.constant 70 : index
    %377 = memref.load %arg4[%c70] : memref<98xf32, #tpu.memory_space<smem>>
    %378 = vector.extract_strided_slice %361 {offsets = [3, 0], sizes = [8, 16], strides = [1, 1]} : vector<14x16xf32> to vector<8x16xf32>
    %379 = vector.broadcast %377 : f32 to vector<8x16xf32>
    %380 = arith.mulf %379, %378 : vector<8x16xf32>
    %381 = arith.addf %359, %380 : vector<8x16xf32>
    %c77 = arith.constant 77 : index
    %382 = memref.load %arg4[%c77] : memref<98xf32, #tpu.memory_space<smem>>
    %383 = vector.extract_strided_slice %361 {offsets = [4, 0], sizes = [8, 16], strides = [1, 1]} : vector<14x16xf32> to vector<8x16xf32>
    %384 = vector.broadcast %382 : f32 to vector<8x16xf32>
    %385 = arith.mulf %384, %383 : vector<8x16xf32>
    %386 = arith.addf %366, %385 : vector<8x16xf32>
    %c84 = arith.constant 84 : index
    %387 = memref.load %arg4[%c84] : memref<98xf32, #tpu.memory_space<smem>>
    %388 = vector.extract_strided_slice %361 {offsets = [5, 0], sizes = [8, 16], strides = [1, 1]} : vector<14x16xf32> to vector<8x16xf32>
    %389 = vector.broadcast %387 : f32 to vector<8x16xf32>
    %390 = arith.mulf %389, %388 : vector<8x16xf32>
    %391 = arith.addf %371, %390 : vector<8x16xf32>
    %c91 = arith.constant 91 : index
    %392 = memref.load %arg4[%c91] : memref<98xf32, #tpu.memory_space<smem>>
    %393 = vector.extract_strided_slice %361 {offsets = [6, 0], sizes = [8, 16], strides = [1, 1]} : vector<14x16xf32> to vector<8x16xf32>
    %394 = vector.broadcast %392 : f32 to vector<8x16xf32>
    %395 = arith.mulf %394, %393 : vector<8x16xf32>
    %396 = arith.addf %376, %395 : vector<8x16xf32>
    %c1_104 = arith.constant 1 : index
    %c0_105 = arith.constant 0 : index
    %c1_106 = arith.constant 1 : index
    %397 = vector.load %arg7[%c1_104, %c0_105, %c1_106] : memref<2x14x22xf32, #tpu.memory_space<vmem>>, vector<1x14x16xf32>
    %398 = vector.shape_cast %397 : vector<1x14x16xf32> to vector<14x16xf32>
    %c50 = arith.constant 50 : index
    %399 = memref.load %arg4[%c50] : memref<98xf32, #tpu.memory_space<smem>>
    %400 = vector.extract_strided_slice %398 {offsets = [0, 0], sizes = [8, 16], strides = [1, 1]} : vector<14x16xf32> to vector<8x16xf32>
    %401 = vector.broadcast %399 : f32 to vector<8x16xf32>
    %402 = arith.mulf %401, %400 : vector<8x16xf32>
    %403 = arith.addf %381, %402 : vector<8x16xf32>
    %c57 = arith.constant 57 : index
    %404 = memref.load %arg4[%c57] : memref<98xf32, #tpu.memory_space<smem>>
    %405 = vector.extract_strided_slice %398 {offsets = [1, 0], sizes = [8, 16], strides = [1, 1]} : vector<14x16xf32> to vector<8x16xf32>
    %406 = vector.broadcast %404 : f32 to vector<8x16xf32>
    %407 = arith.mulf %406, %405 : vector<8x16xf32>
    %408 = arith.addf %386, %407 : vector<8x16xf32>
    %c64 = arith.constant 64 : index
    %409 = memref.load %arg4[%c64] : memref<98xf32, #tpu.memory_space<smem>>
    %410 = vector.extract_strided_slice %398 {offsets = [2, 0], sizes = [8, 16], strides = [1, 1]} : vector<14x16xf32> to vector<8x16xf32>
    %411 = vector.broadcast %409 : f32 to vector<8x16xf32>
    %412 = arith.mulf %411, %410 : vector<8x16xf32>
    %413 = arith.addf %391, %412 : vector<8x16xf32>
    %c71 = arith.constant 71 : index
    %414 = memref.load %arg4[%c71] : memref<98xf32, #tpu.memory_space<smem>>
    %415 = vector.extract_strided_slice %398 {offsets = [3, 0], sizes = [8, 16], strides = [1, 1]} : vector<14x16xf32> to vector<8x16xf32>
    %416 = vector.broadcast %414 : f32 to vector<8x16xf32>
    %417 = arith.mulf %416, %415 : vector<8x16xf32>
    %418 = arith.addf %396, %417 : vector<8x16xf32>
    %c78 = arith.constant 78 : index
    %419 = memref.load %arg4[%c78] : memref<98xf32, #tpu.memory_space<smem>>
    %420 = vector.extract_strided_slice %398 {offsets = [4, 0], sizes = [8, 16], strides = [1, 1]} : vector<14x16xf32> to vector<8x16xf32>
    %421 = vector.broadcast %419 : f32 to vector<8x16xf32>
    %422 = arith.mulf %421, %420 : vector<8x16xf32>
    %423 = arith.addf %403, %422 : vector<8x16xf32>
    %c85 = arith.constant 85 : index
    %424 = memref.load %arg4[%c85] : memref<98xf32, #tpu.memory_space<smem>>
    %425 = vector.extract_strided_slice %398 {offsets = [5, 0], sizes = [8, 16], strides = [1, 1]} : vector<14x16xf32> to vector<8x16xf32>
    %426 = vector.broadcast %424 : f32 to vector<8x16xf32>
    %427 = arith.mulf %426, %425 : vector<8x16xf32>
    %428 = arith.addf %408, %427 : vector<8x16xf32>
    %c92 = arith.constant 92 : index
    %429 = memref.load %arg4[%c92] : memref<98xf32, #tpu.memory_space<smem>>
    %430 = vector.extract_strided_slice %398 {offsets = [6, 0], sizes = [8, 16], strides = [1, 1]} : vector<14x16xf32> to vector<8x16xf32>
    %431 = vector.broadcast %429 : f32 to vector<8x16xf32>
    %432 = arith.mulf %431, %430 : vector<8x16xf32>
    %433 = arith.addf %413, %432 : vector<8x16xf32>
    %c1_107 = arith.constant 1 : index
    %c0_108 = arith.constant 0 : index
    %c2_109 = arith.constant 2 : index
    %434 = vector.load %arg7[%c1_107, %c0_108, %c2_109] : memref<2x14x22xf32, #tpu.memory_space<vmem>>, vector<1x14x16xf32>
    %435 = vector.shape_cast %434 : vector<1x14x16xf32> to vector<14x16xf32>
    %c51 = arith.constant 51 : index
    %436 = memref.load %arg4[%c51] : memref<98xf32, #tpu.memory_space<smem>>
    %437 = vector.extract_strided_slice %435 {offsets = [0, 0], sizes = [8, 16], strides = [1, 1]} : vector<14x16xf32> to vector<8x16xf32>
    %438 = vector.broadcast %436 : f32 to vector<8x16xf32>
    %439 = arith.mulf %438, %437 : vector<8x16xf32>
    %440 = arith.addf %418, %439 : vector<8x16xf32>
    %c58 = arith.constant 58 : index
    %441 = memref.load %arg4[%c58] : memref<98xf32, #tpu.memory_space<smem>>
    %442 = vector.extract_strided_slice %435 {offsets = [1, 0], sizes = [8, 16], strides = [1, 1]} : vector<14x16xf32> to vector<8x16xf32>
    %443 = vector.broadcast %441 : f32 to vector<8x16xf32>
    %444 = arith.mulf %443, %442 : vector<8x16xf32>
    %445 = arith.addf %423, %444 : vector<8x16xf32>
    %c65 = arith.constant 65 : index
    %446 = memref.load %arg4[%c65] : memref<98xf32, #tpu.memory_space<smem>>
    %447 = vector.extract_strided_slice %435 {offsets = [2, 0], sizes = [8, 16], strides = [1, 1]} : vector<14x16xf32> to vector<8x16xf32>
    %448 = vector.broadcast %446 : f32 to vector<8x16xf32>
    %449 = arith.mulf %448, %447 : vector<8x16xf32>
    %450 = arith.addf %428, %449 : vector<8x16xf32>
    %c72 = arith.constant 72 : index
    %451 = memref.load %arg4[%c72] : memref<98xf32, #tpu.memory_space<smem>>
    %452 = vector.extract_strided_slice %435 {offsets = [3, 0], sizes = [8, 16], strides = [1, 1]} : vector<14x16xf32> to vector<8x16xf32>
    %453 = vector.broadcast %451 : f32 to vector<8x16xf32>
    %454 = arith.mulf %453, %452 : vector<8x16xf32>
    %455 = arith.addf %433, %454 : vector<8x16xf32>
    %c79 = arith.constant 79 : index
    %456 = memref.load %arg4[%c79] : memref<98xf32, #tpu.memory_space<smem>>
    %457 = vector.extract_strided_slice %435 {offsets = [4, 0], sizes = [8, 16], strides = [1, 1]} : vector<14x16xf32> to vector<8x16xf32>
    %458 = vector.broadcast %456 : f32 to vector<8x16xf32>
    %459 = arith.mulf %458, %457 : vector<8x16xf32>
    %460 = arith.addf %440, %459 : vector<8x16xf32>
    %c86 = arith.constant 86 : index
    %461 = memref.load %arg4[%c86] : memref<98xf32, #tpu.memory_space<smem>>
    %462 = vector.extract_strided_slice %435 {offsets = [5, 0], sizes = [8, 16], strides = [1, 1]} : vector<14x16xf32> to vector<8x16xf32>
    %463 = vector.broadcast %461 : f32 to vector<8x16xf32>
    %464 = arith.mulf %463, %462 : vector<8x16xf32>
    %465 = arith.addf %445, %464 : vector<8x16xf32>
    %c93 = arith.constant 93 : index
    %466 = memref.load %arg4[%c93] : memref<98xf32, #tpu.memory_space<smem>>
    %467 = vector.extract_strided_slice %435 {offsets = [6, 0], sizes = [8, 16], strides = [1, 1]} : vector<14x16xf32> to vector<8x16xf32>
    %468 = vector.broadcast %466 : f32 to vector<8x16xf32>
    %469 = arith.mulf %468, %467 : vector<8x16xf32>
    %470 = arith.addf %450, %469 : vector<8x16xf32>
    %c1_110 = arith.constant 1 : index
    %c0_111 = arith.constant 0 : index
    %c3_112 = arith.constant 3 : index
    %471 = vector.load %arg7[%c1_110, %c0_111, %c3_112] : memref<2x14x22xf32, #tpu.memory_space<vmem>>, vector<1x14x16xf32>
    %472 = vector.shape_cast %471 : vector<1x14x16xf32> to vector<14x16xf32>
    %c52 = arith.constant 52 : index
    %473 = memref.load %arg4[%c52] : memref<98xf32, #tpu.memory_space<smem>>
    %474 = vector.extract_strided_slice %472 {offsets = [0, 0], sizes = [8, 16], strides = [1, 1]} : vector<14x16xf32> to vector<8x16xf32>
    %475 = vector.broadcast %473 : f32 to vector<8x16xf32>
    %476 = arith.mulf %475, %474 : vector<8x16xf32>
    %477 = arith.addf %455, %476 : vector<8x16xf32>
    %c59 = arith.constant 59 : index
    %478 = memref.load %arg4[%c59] : memref<98xf32, #tpu.memory_space<smem>>
    %479 = vector.extract_strided_slice %472 {offsets = [1, 0], sizes = [8, 16], strides = [1, 1]} : vector<14x16xf32> to vector<8x16xf32>
    %480 = vector.broadcast %478 : f32 to vector<8x16xf32>
    %481 = arith.mulf %480, %479 : vector<8x16xf32>
    %482 = arith.addf %460, %481 : vector<8x16xf32>
    %c66 = arith.constant 66 : index
    %483 = memref.load %arg4[%c66] : memref<98xf32, #tpu.memory_space<smem>>
    %484 = vector.extract_strided_slice %472 {offsets = [2, 0], sizes = [8, 16], strides = [1, 1]} : vector<14x16xf32> to vector<8x16xf32>
    %485 = vector.broadcast %483 : f32 to vector<8x16xf32>
    %486 = arith.mulf %485, %484 : vector<8x16xf32>
    %487 = arith.addf %465, %486 : vector<8x16xf32>
    %c73 = arith.constant 73 : index
    %488 = memref.load %arg4[%c73] : memref<98xf32, #tpu.memory_space<smem>>
    %489 = vector.extract_strided_slice %472 {offsets = [3, 0], sizes = [8, 16], strides = [1, 1]} : vector<14x16xf32> to vector<8x16xf32>
    %490 = vector.broadcast %488 : f32 to vector<8x16xf32>
    %491 = arith.mulf %490, %489 : vector<8x16xf32>
    %492 = arith.addf %470, %491 : vector<8x16xf32>
    %c80 = arith.constant 80 : index
    %493 = memref.load %arg4[%c80] : memref<98xf32, #tpu.memory_space<smem>>
    %494 = vector.extract_strided_slice %472 {offsets = [4, 0], sizes = [8, 16], strides = [1, 1]} : vector<14x16xf32> to vector<8x16xf32>
    %495 = vector.broadcast %493 : f32 to vector<8x16xf32>
    %496 = arith.mulf %495, %494 : vector<8x16xf32>
    %497 = arith.addf %477, %496 : vector<8x16xf32>
    %c87 = arith.constant 87 : index
    %498 = memref.load %arg4[%c87] : memref<98xf32, #tpu.memory_space<smem>>
    %499 = vector.extract_strided_slice %472 {offsets = [5, 0], sizes = [8, 16], strides = [1, 1]} : vector<14x16xf32> to vector<8x16xf32>
    %500 = vector.broadcast %498 : f32 to vector<8x16xf32>
    %501 = arith.mulf %500, %499 : vector<8x16xf32>
    %502 = arith.addf %482, %501 : vector<8x16xf32>
    %c94 = arith.constant 94 : index
    %503 = memref.load %arg4[%c94] : memref<98xf32, #tpu.memory_space<smem>>
    %504 = vector.extract_strided_slice %472 {offsets = [6, 0], sizes = [8, 16], strides = [1, 1]} : vector<14x16xf32> to vector<8x16xf32>
    %505 = vector.broadcast %503 : f32 to vector<8x16xf32>
    %506 = arith.mulf %505, %504 : vector<8x16xf32>
    %507 = arith.addf %487, %506 : vector<8x16xf32>
    %c1_113 = arith.constant 1 : index
    %c0_114 = arith.constant 0 : index
    %c4_115 = arith.constant 4 : index
    %508 = vector.load %arg7[%c1_113, %c0_114, %c4_115] : memref<2x14x22xf32, #tpu.memory_space<vmem>>, vector<1x14x16xf32>
    %509 = vector.shape_cast %508 : vector<1x14x16xf32> to vector<14x16xf32>
    %c53 = arith.constant 53 : index
    %510 = memref.load %arg4[%c53] : memref<98xf32, #tpu.memory_space<smem>>
    %511 = vector.extract_strided_slice %509 {offsets = [0, 0], sizes = [8, 16], strides = [1, 1]} : vector<14x16xf32> to vector<8x16xf32>
    %512 = vector.broadcast %510 : f32 to vector<8x16xf32>
    %513 = arith.mulf %512, %511 : vector<8x16xf32>
    %514 = arith.addf %492, %513 : vector<8x16xf32>
    %c60 = arith.constant 60 : index
    %515 = memref.load %arg4[%c60] : memref<98xf32, #tpu.memory_space<smem>>
    %516 = vector.extract_strided_slice %509 {offsets = [1, 0], sizes = [8, 16], strides = [1, 1]} : vector<14x16xf32> to vector<8x16xf32>
    %517 = vector.broadcast %515 : f32 to vector<8x16xf32>
    %518 = arith.mulf %517, %516 : vector<8x16xf32>
    %519 = arith.addf %497, %518 : vector<8x16xf32>
    %c67 = arith.constant 67 : index
    %520 = memref.load %arg4[%c67] : memref<98xf32, #tpu.memory_space<smem>>
    %521 = vector.extract_strided_slice %509 {offsets = [2, 0], sizes = [8, 16], strides = [1, 1]} : vector<14x16xf32> to vector<8x16xf32>
    %522 = vector.broadcast %520 : f32 to vector<8x16xf32>
    %523 = arith.mulf %522, %521 : vector<8x16xf32>
    %524 = arith.addf %502, %523 : vector<8x16xf32>
    %c74 = arith.constant 74 : index
    %525 = memref.load %arg4[%c74] : memref<98xf32, #tpu.memory_space<smem>>
    %526 = vector.extract_strided_slice %509 {offsets = [3, 0], sizes = [8, 16], strides = [1, 1]} : vector<14x16xf32> to vector<8x16xf32>
    %527 = vector.broadcast %525 : f32 to vector<8x16xf32>
    %528 = arith.mulf %527, %526 : vector<8x16xf32>
    %529 = arith.addf %507, %528 : vector<8x16xf32>
    %c81 = arith.constant 81 : index
    %530 = memref.load %arg4[%c81] : memref<98xf32, #tpu.memory_space<smem>>
    %531 = vector.extract_strided_slice %509 {offsets = [4, 0], sizes = [8, 16], strides = [1, 1]} : vector<14x16xf32> to vector<8x16xf32>
    %532 = vector.broadcast %530 : f32 to vector<8x16xf32>
    %533 = arith.mulf %532, %531 : vector<8x16xf32>
    %534 = arith.addf %514, %533 : vector<8x16xf32>
    %c88 = arith.constant 88 : index
    %535 = memref.load %arg4[%c88] : memref<98xf32, #tpu.memory_space<smem>>
    %536 = vector.extract_strided_slice %509 {offsets = [5, 0], sizes = [8, 16], strides = [1, 1]} : vector<14x16xf32> to vector<8x16xf32>
    %537 = vector.broadcast %535 : f32 to vector<8x16xf32>
    %538 = arith.mulf %537, %536 : vector<8x16xf32>
    %539 = arith.addf %519, %538 : vector<8x16xf32>
    %c95 = arith.constant 95 : index
    %540 = memref.load %arg4[%c95] : memref<98xf32, #tpu.memory_space<smem>>
    %541 = vector.extract_strided_slice %509 {offsets = [6, 0], sizes = [8, 16], strides = [1, 1]} : vector<14x16xf32> to vector<8x16xf32>
    %542 = vector.broadcast %540 : f32 to vector<8x16xf32>
    %543 = arith.mulf %542, %541 : vector<8x16xf32>
    %544 = arith.addf %524, %543 : vector<8x16xf32>
    %c1_116 = arith.constant 1 : index
    %c0_117 = arith.constant 0 : index
    %c5_118 = arith.constant 5 : index
    %545 = vector.load %arg7[%c1_116, %c0_117, %c5_118] : memref<2x14x22xf32, #tpu.memory_space<vmem>>, vector<1x14x16xf32>
    %546 = vector.shape_cast %545 : vector<1x14x16xf32> to vector<14x16xf32>
    %c54 = arith.constant 54 : index
    %547 = memref.load %arg4[%c54] : memref<98xf32, #tpu.memory_space<smem>>
    %548 = vector.extract_strided_slice %546 {offsets = [0, 0], sizes = [8, 16], strides = [1, 1]} : vector<14x16xf32> to vector<8x16xf32>
    %549 = vector.broadcast %547 : f32 to vector<8x16xf32>
    %550 = arith.mulf %549, %548 : vector<8x16xf32>
    %551 = arith.addf %529, %550 : vector<8x16xf32>
    %c61 = arith.constant 61 : index
    %552 = memref.load %arg4[%c61] : memref<98xf32, #tpu.memory_space<smem>>
    %553 = vector.extract_strided_slice %546 {offsets = [1, 0], sizes = [8, 16], strides = [1, 1]} : vector<14x16xf32> to vector<8x16xf32>
    %554 = vector.broadcast %552 : f32 to vector<8x16xf32>
    %555 = arith.mulf %554, %553 : vector<8x16xf32>
    %556 = arith.addf %534, %555 : vector<8x16xf32>
    %c68 = arith.constant 68 : index
    %557 = memref.load %arg4[%c68] : memref<98xf32, #tpu.memory_space<smem>>
    %558 = vector.extract_strided_slice %546 {offsets = [2, 0], sizes = [8, 16], strides = [1, 1]} : vector<14x16xf32> to vector<8x16xf32>
    %559 = vector.broadcast %557 : f32 to vector<8x16xf32>
    %560 = arith.mulf %559, %558 : vector<8x16xf32>
    %561 = arith.addf %539, %560 : vector<8x16xf32>
    %c75 = arith.constant 75 : index
    %562 = memref.load %arg4[%c75] : memref<98xf32, #tpu.memory_space<smem>>
    %563 = vector.extract_strided_slice %546 {offsets = [3, 0], sizes = [8, 16], strides = [1, 1]} : vector<14x16xf32> to vector<8x16xf32>
    %564 = vector.broadcast %562 : f32 to vector<8x16xf32>
    %565 = arith.mulf %564, %563 : vector<8x16xf32>
    %566 = arith.addf %544, %565 : vector<8x16xf32>
    %c82 = arith.constant 82 : index
    %567 = memref.load %arg4[%c82] : memref<98xf32, #tpu.memory_space<smem>>
    %568 = vector.extract_strided_slice %546 {offsets = [4, 0], sizes = [8, 16], strides = [1, 1]} : vector<14x16xf32> to vector<8x16xf32>
    %569 = vector.broadcast %567 : f32 to vector<8x16xf32>
    %570 = arith.mulf %569, %568 : vector<8x16xf32>
    %571 = arith.addf %551, %570 : vector<8x16xf32>
    %c89 = arith.constant 89 : index
    %572 = memref.load %arg4[%c89] : memref<98xf32, #tpu.memory_space<smem>>
    %573 = vector.extract_strided_slice %546 {offsets = [5, 0], sizes = [8, 16], strides = [1, 1]} : vector<14x16xf32> to vector<8x16xf32>
    %574 = vector.broadcast %572 : f32 to vector<8x16xf32>
    %575 = arith.mulf %574, %573 : vector<8x16xf32>
    %576 = arith.addf %556, %575 : vector<8x16xf32>
    %c96 = arith.constant 96 : index
    %577 = memref.load %arg4[%c96] : memref<98xf32, #tpu.memory_space<smem>>
    %578 = vector.extract_strided_slice %546 {offsets = [6, 0], sizes = [8, 16], strides = [1, 1]} : vector<14x16xf32> to vector<8x16xf32>
    %579 = vector.broadcast %577 : f32 to vector<8x16xf32>
    %580 = arith.mulf %579, %578 : vector<8x16xf32>
    %581 = arith.addf %561, %580 : vector<8x16xf32>
    %c1_119 = arith.constant 1 : index
    %c0_120 = arith.constant 0 : index
    %c6_121 = arith.constant 6 : index
    %582 = vector.load %arg7[%c1_119, %c0_120, %c6_121] : memref<2x14x22xf32, #tpu.memory_space<vmem>>, vector<1x14x16xf32>
    %583 = vector.shape_cast %582 : vector<1x14x16xf32> to vector<14x16xf32>
    %c55 = arith.constant 55 : index
    %584 = memref.load %arg4[%c55] : memref<98xf32, #tpu.memory_space<smem>>
    %585 = vector.extract_strided_slice %583 {offsets = [0, 0], sizes = [8, 16], strides = [1, 1]} : vector<14x16xf32> to vector<8x16xf32>
    %586 = vector.broadcast %584 : f32 to vector<8x16xf32>
    %587 = arith.mulf %586, %585 : vector<8x16xf32>
    %588 = arith.addf %566, %587 : vector<8x16xf32>
    %c62 = arith.constant 62 : index
    %589 = memref.load %arg4[%c62] : memref<98xf32, #tpu.memory_space<smem>>
    %590 = vector.extract_strided_slice %583 {offsets = [1, 0], sizes = [8, 16], strides = [1, 1]} : vector<14x16xf32> to vector<8x16xf32>
    %591 = vector.broadcast %589 : f32 to vector<8x16xf32>
    %592 = arith.mulf %591, %590 : vector<8x16xf32>
    %593 = arith.addf %571, %592 : vector<8x16xf32>
    %c69 = arith.constant 69 : index
    %594 = memref.load %arg4[%c69] : memref<98xf32, #tpu.memory_space<smem>>
    %595 = vector.extract_strided_slice %583 {offsets = [2, 0], sizes = [8, 16], strides = [1, 1]} : vector<14x16xf32> to vector<8x16xf32>
    %596 = vector.broadcast %594 : f32 to vector<8x16xf32>
    %597 = arith.mulf %596, %595 : vector<8x16xf32>
    %598 = arith.addf %576, %597 : vector<8x16xf32>
    %c76 = arith.constant 76 : index
    %599 = memref.load %arg4[%c76] : memref<98xf32, #tpu.memory_space<smem>>
    %600 = vector.extract_strided_slice %583 {offsets = [3, 0], sizes = [8, 16], strides = [1, 1]} : vector<14x16xf32> to vector<8x16xf32>
    %601 = vector.broadcast %599 : f32 to vector<8x16xf32>
    %602 = arith.mulf %601, %600 : vector<8x16xf32>
    %603 = arith.addf %581, %602 : vector<8x16xf32>
    %c83 = arith.constant 83 : index
    %604 = memref.load %arg4[%c83] : memref<98xf32, #tpu.memory_space<smem>>
    %605 = vector.extract_strided_slice %583 {offsets = [4, 0], sizes = [8, 16], strides = [1, 1]} : vector<14x16xf32> to vector<8x16xf32>
    %606 = vector.broadcast %604 : f32 to vector<8x16xf32>
    %607 = arith.mulf %606, %605 : vector<8x16xf32>
    %608 = arith.addf %588, %607 : vector<8x16xf32>
    %c90 = arith.constant 90 : index
    %609 = memref.load %arg4[%c90] : memref<98xf32, #tpu.memory_space<smem>>
    %610 = vector.extract_strided_slice %583 {offsets = [5, 0], sizes = [8, 16], strides = [1, 1]} : vector<14x16xf32> to vector<8x16xf32>
    %611 = vector.broadcast %609 : f32 to vector<8x16xf32>
    %612 = arith.mulf %611, %610 : vector<8x16xf32>
    %613 = arith.addf %593, %612 : vector<8x16xf32>
    %c97 = arith.constant 97 : index
    %614 = memref.load %arg4[%c97] : memref<98xf32, #tpu.memory_space<smem>>
    %615 = vector.extract_strided_slice %583 {offsets = [6, 0], sizes = [8, 16], strides = [1, 1]} : vector<14x16xf32> to vector<8x16xf32>
    %616 = vector.broadcast %614 : f32 to vector<8x16xf32>
    %617 = arith.mulf %616, %615 : vector<8x16xf32>
    %618 = arith.addf %598, %617 : vector<8x16xf32>
    %619 = arith.addf %613, %618 : vector<8x16xf32>
    %620 = arith.addf %603, %608 : vector<8x16xf32>
    %621 = arith.addf %619, %620 : vector<8x16xf32>
    %c0_122 = arith.constant 0 : index
    %622 = memref.load %arg5[%c0_122] : memref<1xf32, #tpu.memory_space<smem>>
    %623 = vector.broadcast %622 : f32 to vector<8x16xf32>
    %624 = arith.addf %621, %623 : vector<8x16xf32>
    %625 = arith.negf %624 : vector<8x16xf32>
    %626 = math.exp %625 : vector<8x16xf32>
    %cst_123 = arith.constant 1.000000e+00 : f32
    %627 = vector.broadcast %cst_123 : f32 to vector<8x16xf32>
    %628 = arith.addf %627, %626 : vector<8x16xf32>
    %629 = arith.divf %627, %628 : vector<8x16xf32>
    %630 = vector.extract_strided_slice %629 {offsets = [0, 0], sizes = [1, 16], strides = [1, 1]} : vector<8x16xf32> to vector<1x16xf32>
    %c0_124 = arith.constant 0 : index
    %c0_125 = arith.constant 0 : index
    %631 = vector.load %arg8[%c0_124, %c0_125] : memref<1x128xf32, #tpu.memory_space<vmem>>, vector<1x16xf32>
    tpu.vector_store %arg8[%c0_124, %c0_125], %630 {strides = array<i32>} : memref<1x128xf32, #tpu.memory_space<vmem>>, vector<1x16xf32>,
    %632 = vector.extract_strided_slice %629 {offsets = [1, 0], sizes = [1, 16], strides = [1, 1]} : vector<8x16xf32> to vector<1x16xf32>
    %c0_126 = arith.constant 0 : index
    %c16_127 = arith.constant 16 : index
    %633 = vector.load %arg8[%c0_126, %c16_127] : memref<1x128xf32, #tpu.memory_space<vmem>>, vector<1x16xf32>
    tpu.vector_store %arg8[%c0_126, %c16_127], %632 {strides = array<i32>} : memref<1x128xf32, #tpu.memory_space<vmem>>, vector<1x16xf32>,
    %634 = vector.extract_strided_slice %629 {offsets = [2, 0], sizes = [1, 16], strides = [1, 1]} : vector<8x16xf32> to vector<1x16xf32>
    %c0_128 = arith.constant 0 : index
    %c32_129 = arith.constant 32 : index
    %635 = vector.load %arg8[%c0_128, %c32_129] : memref<1x128xf32, #tpu.memory_space<vmem>>, vector<1x16xf32>
    tpu.vector_store %arg8[%c0_128, %c32_129], %634 {strides = array<i32>} : memref<1x128xf32, #tpu.memory_space<vmem>>, vector<1x16xf32>,
    %636 = vector.extract_strided_slice %629 {offsets = [3, 0], sizes = [1, 16], strides = [1, 1]} : vector<8x16xf32> to vector<1x16xf32>
    %c0_130 = arith.constant 0 : index
    %c48_131 = arith.constant 48 : index
    %637 = vector.load %arg8[%c0_130, %c48_131] : memref<1x128xf32, #tpu.memory_space<vmem>>, vector<1x16xf32>
    tpu.vector_store %arg8[%c0_130, %c48_131], %636 {strides = array<i32>} : memref<1x128xf32, #tpu.memory_space<vmem>>, vector<1x16xf32>,
    %638 = vector.extract_strided_slice %629 {offsets = [4, 0], sizes = [1, 16], strides = [1, 1]} : vector<8x16xf32> to vector<1x16xf32>
    %c0_132 = arith.constant 0 : index
    %c64_133 = arith.constant 64 : index
    %639 = vector.load %arg8[%c0_132, %c64_133] : memref<1x128xf32, #tpu.memory_space<vmem>>, vector<1x16xf32>
    tpu.vector_store %arg8[%c0_132, %c64_133], %638 {strides = array<i32>} : memref<1x128xf32, #tpu.memory_space<vmem>>, vector<1x16xf32>,
    %640 = vector.extract_strided_slice %629 {offsets = [5, 0], sizes = [1, 16], strides = [1, 1]} : vector<8x16xf32> to vector<1x16xf32>
    %c0_134 = arith.constant 0 : index
    %c80_135 = arith.constant 80 : index
    %641 = vector.load %arg8[%c0_134, %c80_135] : memref<1x128xf32, #tpu.memory_space<vmem>>, vector<1x16xf32>
    tpu.vector_store %arg8[%c0_134, %c80_135], %640 {strides = array<i32>} : memref<1x128xf32, #tpu.memory_space<vmem>>, vector<1x16xf32>,
    %642 = vector.extract_strided_slice %629 {offsets = [6, 0], sizes = [1, 16], strides = [1, 1]} : vector<8x16xf32> to vector<1x16xf32>
    %c0_136 = arith.constant 0 : index
    %c96_137 = arith.constant 96 : index
    %643 = vector.load %arg8[%c0_136, %c96_137] : memref<1x128xf32, #tpu.memory_space<vmem>>, vector<1x16xf32>
    tpu.vector_store %arg8[%c0_136, %c96_137], %642 {strides = array<i32>} : memref<1x128xf32, #tpu.memory_space<vmem>>, vector<1x16xf32>,
    %644 = vector.extract_strided_slice %629 {offsets = [7, 0], sizes = [1, 16], strides = [1, 1]} : vector<8x16xf32> to vector<1x16xf32>
    %c0_138 = arith.constant 0 : index
    %c112 = arith.constant 112 : index
    %645 = vector.load %arg8[%c0_138, %c112] : memref<1x128xf32, #tpu.memory_space<vmem>>, vector<1x16xf32>
    tpu.vector_store %arg8[%c0_138, %c112], %644 {strides = array<i32>} : memref<1x128xf32, #tpu.memory_space<vmem>>, vector<1x16xf32>,
    %c0_139 = arith.constant 0 : index
    %c0_140 = arith.constant 0 : index
    %646 = vector.load %arg8[%c0_139, %c0_140] : memref<1x128xf32, #tpu.memory_space<vmem>>, vector<1x128xf32>
    %c0_141 = arith.constant 0 : index
    %c0_142 = arith.constant 0 : index
    %c0_143 = arith.constant 0 : index
    %647 = vector.load %arg2[%c0_141, %c0_142, %c0_143] : memref<1x4x128xf32, #tpu.memory_space<vmem>>, vector<1x4x128xf32>
    %648 = vector.shape_cast %647 : vector<1x4x128xf32> to vector<4x128xf32>
    %649 = vector.broadcast %646 : vector<1x128xf32> to vector<4x128xf32>
    %650 = arith.mulf %648, %649 : vector<4x128xf32>
    %c0_144 = arith.constant 0 : index
    %c0_145 = arith.constant 0 : index
    %c0_146 = arith.constant 0 : index
    %651 = vector.load %arg6[%c0_144, %c0_145, %c0_146] : memref<1x4x128xf32, #tpu.memory_space<vmem>>, vector<1x4x128xf32>
    %652 = vector.shape_cast %651 : vector<1x4x128xf32> to vector<4x128xf32>
    %653 = vector.shape_cast %650 : vector<4x128xf32> to vector<1x4x128xf32>
    tpu.vector_store %arg6[%c0_144, %c0_145, %c0_146], %653 {strides = array<i32>} : memref<1x4x128xf32, #tpu.memory_space<vmem>>, vector<1x4x128xf32>,
    return
  }
  func.func @transform_0(%arg0: i32, %arg1: i32) -> (i32, i32, i32) {
    %c0_i32 = arith.constant 0 : i32
    %c0_i32_0 = arith.constant 0 : i32
    return %arg0, %c0_i32, %arg1 : i32, i32, i32
  }
  func.func @transform_1(%arg0: i32, %arg1: i32) -> (i32, i32, i32, i32) {
    %c2_i32 = arith.constant 2 : i32
    %0 = arith.muli %arg0, %c2_i32 : i32
    %1 = arith.addi %0, %arg1 : i32
    %c0_i32 = arith.constant 0 : i32
    %c0_i32_0 = arith.constant 0 : i32
    %c0_i32_1 = arith.constant 0 : i32
    %c0_i32_2 = arith.constant 0 : i32
    return %1, %c0_i32, %c0_i32_0, %c0_i32_1 : i32, i32, i32, i32
  }
  func.func @transform_2(%arg0: i32, %arg1: i32) -> i32 {
    %c0_i32 = arith.constant 0 : i32
    %c0_i32_0 = arith.constant 0 : i32
    return %c0_i32 : i32
  }
  func.func @transform_3(%arg0: i32, %arg1: i32) -> i32 {
    %c0_i32 = arith.constant 0 : i32
    %c0_i32_0 = arith.constant 0 : i32
    return %c0_i32 : i32
  }
  func.func @transform_4(%arg0: i32, %arg1: i32) -> (i32, i32, i32) {
    %c0_i32 = arith.constant 0 : i32
    %c0_i32_0 = arith.constant 0 : i32
    return %arg0, %c0_i32, %arg1 : i32, i32, i32
  }
}

</mosaic_0001>

<llo_original>
// kernel: spatial_gate.1
$region0: #{spatial_gate.1}
  #allocation0 [shape = 'u32[]', space=smem, size = 0x4, offset = 0x4, fixed_abs, tag = 'smem constant byte address 0x4 - core index']
  #allocation1 [shape = 'u32[144,128]{1,0:T(1,128)}', space=vmem, size = 0x12000, scoped, tag = 'internal scratch']
  #allocation2 [shape = 'f32[2,14,22]{2,1,0:T(8,128)}', space=vmem, size = 0x4000, scoped, tag = 'scratch operand']
  #allocation3 [shape = 'f32[1,128]{1,0:T(1,128)}', space=vmem, size = 0x200, scoped, tag = 'scratch operand']
  #allocation4 [shape = 'f32[1]{0:T(128)S(6)}', space=smem, size = 0x200, scoped, tag = 'scoped memory for spatial_gate.1']
  %s0 = inlined_call_operand.vmem [shape: f32[2,4,256], index: 0, kind: input, shape index: {}]
  %s1 = inlined_call_operand.vmem [shape: f32[4,2,6,16], index: 1, kind: input, shape index: {}]
  %s2 = inlined_call_operand.vmem [shape: f32[98], index: 2, kind: input, shape index: {}]
  %s3 = inlined_call_operand.<no memory space> [shape: f32[1], index: 3, kind: input, shape index: {}]
  %s4 = inlined_call_operand.vmem [shape: f32[2,4,256], index: 4, kind: output, shape index: {}]
  %s5 = sld [smem:[#allocation0]]
  $region53: #{spatial_gate.1} parent=0
    _
  %s7 = ssub.s32 1, %s5
  %s8 = scalar_select 0, %s7, %s5
  %9 = sst [smem:[#allocation4]] %s3
  $region1: #{spatial_gate.1} parent=0
    #allocation5 [shape = 'u8[512]{0}', space=smem, size = 0x200, scoped, tag = 'input window, operand 2, single buffered']
    #allocation6 [shape = 's32[2]{0}', space=sflag, size = 0x8, scoped, tag = 'scoped memory for spatial_gate.1']
    %10 = vsyncpa [#allocation6], 0
    loop: start=0, step=1, limit=6
    $region2: #{spatial_gate.1} parent=1 // loop_pre_header
      _
    $region3: #{spatial_gate.1} parent=1 // loop_header
      %s12 = sphi 0, %s16
      %p13 = scmp.ge.s32.totalorder %s12, 6
      %s19 = sphi 0, %s31
      %s20 = sphi 0, %s27
      %s21 = sphi 0, %s19
      %s22 = sphi 0, %s20
      %s23 = sphi 0, %s21
      %s24 = sphi 0, %s22
      %s36 = sphi 0, %s38
      %s39 = sphi 0, %s36
      %s40 = sphi 0, %s39
      %s56 = sphi 0, %s40
      %s66 = sphi 0, %s68
      %s69 = sphi 0, %s66
      %s70 = sphi 0, %s69
      %s86 = sphi 0, %s70
      %s90 = sphi 0, %s90
      %s92 = sphi 0, %s90
      %s93 = sphi 0, %s92
      %s107 = sphi 0, %s93
      %s111 = sphi 0, %s111
      %s113 = sphi 0, %s111
      %s114 = sphi 0, %s113
      %s128 = sphi 0, %s114
      %s136 = sphi 0, %s138
      %s139 = sphi 0, %s136
      %s140 = sphi 0, %s139
      %s156 = sphi 0, %s140
    $region4: #{spatial_gate.1} parent=1 // loop_header_branch
      %15 = sbr.rel (%p13) target = $region8
    $region5: #{spatial_gate.1} parent=1 // loop_body
      %s17 = ssub.s32 %s12, 1
      %s18 = ssub.s32 %s12, 2
      %s25 = sadd.s32 1, %s20
      %p26 = scmp.ge.s32.totalorder %s25, 2
      %s27 = scalar_select %p26, 0, %s25
      %s28 = sadd.s32 1, %s19
      %s29 = scalar_select %p26, %s28, %s19
      %p30 = scmp.ge.s32.totalorder %s29, 2
      %s31 = scalar_select %p30, 0, %s29
      %s32 = ssub.s32 %s19, %s31
      %s33 = ssub.s32 %s20, %s27
      %s34 = sor.u32 %s32, %s33
      %p35 = scmp.eq.s32.totalorder %s34, 0
      %s37 = sadd.s32 %s36, 1
      %s38 = scalar_select %p35, %s36, %s37
      %p41 = pneg %p35
      %p42 = scmp.eq.s32.totalorder %s12, 3
      %p43 = por %p41, %p42
      %p44 = scmp.ne.s32.totalorder %s36, %s39
      %p45 = scmp.eq.s32.totalorder %s12, 0
      %p46 = por %p44, %p45
      %p47 = scmp.ne.s32.totalorder %s36, %s39
      %p48 = scmp.eq.s32.totalorder %s17, 3
      %p49 = por %p47, %p48
      %p50 = scmp.ne.s32.totalorder %s39, %s40
      %p51 = scmp.eq.s32.totalorder %s17, 0
      %p52 = por %p50, %p51
      %p53 = scmp.ne.s32.totalorder %s39, %s40
      %p54 = scmp.eq.s32.totalorder %s18, 3
      %p55 = por %p53, %p54
      %p57 = scmp.ne.s32.totalorder %s40, %s56
      %p58 = scmp.eq.s32.totalorder %s18, 0
      %p59 = por %p57, %p58
      %s60 = smul.u32 %s19, 2
      %s61 = sadd.s32 %s60, %s20
      %s62 = smul.u32 %s31, 2
      %s63 = sadd.s32 %s62, %s27
      %s64 = ssub.s32 %s61, %s63
      %p65 = scmp.eq.s32.totalorder %s64, 0
      %s67 = sadd.s32 %s66, 1
      %s68 = scalar_select %p65, %s66, %s67
      %p71 = pneg %p65
      %p72 = scmp.eq.s32.totalorder %s12, 3
      %p73 = por %p71, %p72
      %p74 = scmp.ne.s32.totalorder %s66, %s69
      %p75 = scmp.eq.s32.totalorder %s12, 0
      %p76 = por %p74, %p75
      %p77 = scmp.ne.s32.totalorder %s66, %s69
      %p78 = scmp.eq.s32.totalorder %s17, 3
      %p79 = por %p77, %p78
      %p80 = scmp.ne.s32.totalorder %s69, %s70
      %p81 = scmp.eq.s32.totalorder %s17, 0
      %p82 = por %p80, %p81
      %p83 = scmp.ne.s32.totalorder %s69, %s70
      %p84 = scmp.eq.s32.totalorder %s18, 3
      %p85 = por %p83, %p84
      %p87 = scmp.ne.s32.totalorder %s70, %s86
      %p88 = scmp.eq.s32.totalorder %s18, 0
      %p89 = por %p87, %p88
      %s91 = sadd.s32 %s90, 1
      %p94 = scmp.eq.s32.totalorder %s12, 3
      %p95 = scmp.ne.s32.totalorder %s90, %s92
      %p96 = scmp.eq.s32.totalorder %s12, 0
      %p97 = por %p95, %p96
      %p98 = scmp.ne.s32.totalorder %s90, %s92
      %p99 = scmp.eq.s32.totalorder %s17, 3
      %p100 = por %p98, %p99
      %p101 = scmp.ne.s32.totalorder %s92, %s93
      %p102 = scmp.eq.s32.totalorder %s17, 0
      %p103 = por %p101, %p102
      %p104 = scmp.ne.s32.totalorder %s92, %s93
      %p105 = scmp.eq.s32.totalorder %s18, 3
      %p106 = por %p104, %p105
      %p108 = scmp.ne.s32.totalorder %s93, %s107
      %p109 = scmp.eq.s32.totalorder %s18, 0
      %p110 = por %p108, %p109
      %s112 = sadd.s32 %s111, 1
      %p115 = scmp.eq.s32.totalorder %s12, 3
      %p116 = scmp.ne.s32.totalorder %s111, %s113
      %p117 = scmp.eq.s32.totalorder %s12, 0
      %p118 = por %p116, %p117
      %p119 = scmp.ne.s32.totalorder %s111, %s113
      %p120 = scmp.eq.s32.totalorder %s17, 3
      %p121 = por %p119, %p120
      %p122 = scmp.ne.s32.totalorder %s113, %s114
      %p123 = scmp.eq.s32.totalorder %s17, 0
      %p124 = por %p122, %p123
      %p125 = scmp.ne.s32.totalorder %s113, %s114
      %p126 = scmp.eq.s32.totalorder %s18, 3
      %p127 = por %p125, %p126
      %p129 = scmp.ne.s32.totalorder %s114, %s128
      %p130 = scmp.eq.s32.totalorder %s18, 0
      %p131 = por %p129, %p130
      %s132 = ssub.s32 %s19, %s31
      %s133 = ssub.s32 %s20, %s27
      %s134 = sor.u32 %s132, %s133
      %p135 = scmp.eq.s32.totalorder %s134, 0
      %s137 = sadd.s32 %s136, 1
      %s138 = scalar_select %p135, %s136, %s137
      %p141 = pneg %p135
      %p142 = scmp.eq.s32.totalorder %s12, 3
      %p143 = por %p141, %p142
      %p144 = scmp.ne.s32.totalorder %s136, %s139
      %p145 = scmp.eq.s32.totalorder %s12, 0
      %p146 = por %p144, %p145
      %p147 = scmp.ne.s32.totalorder %s136, %s139
      %p148 = scmp.eq.s32.totalorder %s17, 3
      %p149 = por %p147, %p148
      %p150 = scmp.ne.s32.totalorder %s139, %s140
      %p151 = scmp.eq.s32.totalorder %s17, 0
      %p152 = por %p150, %p151
      %p153 = scmp.ne.s32.totalorder %s139, %s140
      %p154 = scmp.eq.s32.totalorder %s18, 3
      %p155 = por %p153, %p154
      %p157 = scmp.ne.s32.totalorder %s140, %s156
      %p158 = scmp.eq.s32.totalorder %s18, 0
      %p159 = por %p157, %p158
      %p160 = scmp.le.s32.totalorder 1, %s12
      %p161 = scmp.lt.s32.totalorder %s12, 5
      %p162 = pnand %p160, %p161
      %p163 = pneg %p162
      // Predicated region
      $region9: #{spatial_gate.1} parent=5 // pred_check
        _
      $region10: #{spatial_gate.1} parent=5 // pred_check_branch
        %165 = sbr.rel (%p162) target = $region12
      $region11: #{spatial_gate.1} parent=5 // pred_region
        %s166 = ssub.s32 %s12, 1
        // Predicated region
        $region13: #{spatial_gate.1} parent=11 // pred_check
          %p167 = pneg %p103
        $region14: #{spatial_gate.1} parent=11 // pred_check_branch
          %169 = sbr.rel (%p167) target = $region16
        $region15: #{spatial_gate.1} parent=11 // pred_region
          %s171 = ssub.s32 16, 16
          %172 = vsyncadd [#allocation6], %s171
          %s174 = sshll.u32 %s2, 4
          %s175 = int_to_ptr.vmem [resolvable:$true] %s174
          %177 = dma.vmem_to_smem %s175, 16, [#allocation5], [#allocation6]
        $region16: #{spatial_gate.1} parent=11 // pred_fallthru
          _
        // Predicated region
        $region17: #{spatial_gate.1} parent=11 // pred_check
          %p178 = pneg %p124
        $region18: #{spatial_gate.1} parent=11 // pred_check_branch
          %180 = sbr.rel (%p178) target = $region20
        $region19: #{spatial_gate.1} parent=11 // pred_region
          _
        $region20: #{spatial_gate.1} parent=11 // pred_fallthru
          _
      $region12: #{spatial_gate.1} parent=5 // pred_fallthru
        _
      %p181 = scmp.lt.s32.totalorder %s12, 4
      // Predicated region
      $region21: #{spatial_gate.1} parent=5 // pred_check
        %p182 = pneg %p181
      $region22: #{spatial_gate.1} parent=5 // pred_check_branch
        %184 = sbr.rel (%p182) target = $region24
      $region23: #{spatial_gate.1} parent=5 // pred_region
        // Predicated region
        $region25: #{spatial_gate.1} parent=23 // pred_check
          %p185 = pneg %p46
        $region26: #{spatial_gate.1} parent=23 // pred_check_branch
          %187 = sbr.rel (%p185) target = $region28
        $region27: #{spatial_gate.1} parent=23 // pred_region
          %p188 = scmp.lt.s32.totalorder %s19, 1
          %s189 = scalar_select %p188, %s19, 1
          %p190 = scmp.lt.s32.totalorder %s20, 1
          %s191 = scalar_select %p190, %s20, 1
          %s192 = smul.addr %s189, 2
          %s193 = sadd.s32 %s191, %s192
          %s194 = smul.addr %s193, 4
          %s195 = scalar_lea.vmem %s0, %s194
        $region28: #{spatial_gate.1} parent=23 // pred_fallthru
          _
        // Predicated region
        $region29: #{spatial_gate.1} parent=23 // pred_check
          %p196 = pneg %p76
        $region30: #{spatial_gate.1} parent=23 // pred_check_branch
          %198 = sbr.rel (%p196) target = $region32
        $region31: #{spatial_gate.1} parent=23 // pred_region
          %s199 = smul.u32 %s19, 2
          %s200 = sadd.s32 %s199, %s20
          %p201 = scmp.lt.s32.totalorder %s200, 3
          %s202 = scalar_select %p201, %s200, 3
          %s203 = smul.addr %s202, 2
          %s204 = smul.addr %s203, 8
          %s205 = scalar_lea.vmem %s1, %s204
          %s206 = smul.u32 %s19, 2
          %s207 = sadd.s32 %s206, %s20
        $region32: #{spatial_gate.1} parent=23 // pred_fallthru
          _
      $region24: #{spatial_gate.1} parent=5 // pred_fallthru
        _
      %p208 = scmp.le.s32.totalorder 1, %s12
      %p209 = scmp.lt.s32.totalorder %s12, 5
      %p210 = pnand %p208, %p209
      %p211 = pneg %p210
      // Predicated region
      $region33: #{spatial_gate.1} parent=5 // pred_check
        _
      $region34: #{spatial_gate.1} parent=5 // pred_check_branch
        %213 = sbr.rel (%p210) target = $region36
      $region35: #{spatial_gate.1} parent=5 // pred_region
        %s214 = ssub.s32 %s12, 1
        // Predicated region
        $region37: #{spatial_gate.1} parent=35 // pred_check
          %p215 = pneg %p103
        $region38: #{spatial_gate.1} parent=35 // pred_check_branch
          %217 = sbr.rel (%p215) target = $region40
        $region39: #{spatial_gate.1} parent=35 // pred_region
          %218 = dma.done [#allocation6], 16
        $region40: #{spatial_gate.1} parent=35 // pred_fallthru
          _
        %219 = sfence
        %p220 = scmp.lt.s32.totalorder %s21, 1
        %s221 = scalar_select %p220, %s21, 1
        %p222 = scmp.lt.s32.totalorder %s22, 1
        %s223 = scalar_select %p222, %s22, 1
        %s224 = smul.addr %s221, 2
        %s225 = sadd.s32 %s223, %s224
        %s226 = smul.addr %s225, 4
        %s227 = scalar_lea.vmem %s0, %s226
        %p228 = pneg %p52
        %p229 = pneg %p49
        %s230 = smul.u32 %s21, 2
        %s231 = sadd.s32 %s230, %s22
        %p232 = scmp.lt.s32.totalorder %s231, 3
        %s233 = scalar_select %p232, %s231, 3
        %s234 = smul.addr %s233, 2
        %s235 = smul.addr %s234, 8
        %s236 = scalar_lea.vmem %s1, %s235
        %p237 = pneg %p82
        %p238 = pneg %p79
        %p239 = pneg %p103
        %p240 = pneg %p100
        %p241 = pneg %p124
        %p242 = pneg %p121
        %p243 = pneg %p152
        %p244 = pneg %p149
        %p245 = scmp.lt.s32.totalorder %s21, 1
        %s246 = scalar_select %p245, %s21, 1
        %p247 = scmp.lt.s32.totalorder %s22, 1
        %s248 = scalar_select %p247, %s22, 1
        %s249 = smul.addr %s246, 2
        %s250 = sadd.s32 %s248, %s249
        %s251 = smul.addr %s250, 4
        %s252 = scalar_lea.vmem %s4, %s251
        %p253 = scmp.lt.s32.totalorder %s21, 1
        %s254 = scalar_select %p253, %s21, 1
        %p255 = scmp.lt.s32.totalorder %s22, 1
        %s256 = scalar_select %p255, %s22, 1
        %s257 = smul.addr %s254, 2
        %s258 = sadd.s32 %s256, %s257
        %s259 = smul.addr %s258, 4
        %s260 = scalar_lea.vmem %s0, %s259
        %s261 = smul.u32 %s21, 2
        %s262 = sadd.s32 %s261, %s22
        %p263 = scmp.lt.s32.totalorder %s262, 3
        %s264 = scalar_select %p263, %s262, 3
        %s265 = smul.addr %s264, 2
        %s266 = smul.addr %s265, 8
        %s267 = scalar_lea.vmem %s1, %s266
        %s268 = smul.u32 %s21, 2
        %s269 = sadd.s32 %s268, %s22
        %p270 = scmp.lt.s32.totalorder %s21, 1
        %s271 = scalar_select %p270, %s21, 1
        %p272 = scmp.lt.s32.totalorder %s22, 1
        %s273 = scalar_select %p272, %s22, 1
        %s274 = smul.addr %s271, 2
        %s275 = sadd.s32 %s273, %s274
        %s276 = smul.addr %s275, 4
        %s277 = scalar_lea.vmem %s4, %s276
        %vm278 = vcmask 23552
        %279 = vst.msk [vmem:[#allocation2] sm:$0xff] %vm278, 0.0
        %vm280 = vcmask 21504
        %281 = vst.msk [vmem:[#allocation2 + $0x8] sm:$0x3f] %vm280, 0.0
        %282 = vst.msk [vmem:[#allocation2 + $0x10] sm:$0xff] %vm278, 0.0
        %283 = vst.msk [vmem:[#allocation2 + $0x18] sm:$0x3f] %vm280, 0.0
        %vm284 = vcmask 179352
        %285 = vst.msk [vmem:[#allocation2] sm:$0xff] %vm284, 0.0
        %vm286 = vcmask 177304
        %287 = vst.msk [vmem:[#allocation2 + $0x8] sm:$0x3f] %vm286, 0.0
        %288 = vst.msk [vmem:[#allocation2 + $0x10] sm:$0xff] %vm284, 0.0
        %289 = vst.msk [vmem:[#allocation2 + $0x18] sm:$0x3f] %vm286, 0.0
        %v290 = vld [vmem:[%s260] sm:$0xf]
        %vm291 = vcmask 1043456
        %v292 = vsel %vm291, %v290, -inf
        %v293 = vrot.slane %v292, 4
        %v294 = vmax.f32 %v292, %v293
        %v295 = vrot.slane %v294, 2
        %v296 = vmax.f32 %v294, %v295
        %v297 = vrot.slane %v296, 1
        %v298 = vmax.f32 %v296, %v297
        %v299 = vsel %vm291, %v290, 0.0
        %v300 = vrot.slane %v299, 4
        %v301 = vadd.f32 %v299, %v300
        %v302 = vrot.slane %v301, 2
        %v303 = vadd.f32 %v301, %v302
        %v304 = vrot.slane %v303, 1
        %v305 = vadd.f32 %v303, %v304
        %v306 = vmul.f32 %v305, 0.25
        %308 = vrot.lane.b32.xlu0 %v298, 3
        %v309 = vpop.permute.xlu0 %308
        %vm311 = vcmask 147480
        %312 = vst.msk [vmem:[#allocation2 + $0x3] sm:$0x1] %vm311, %v309
        %314 = vrot.lane.b32.xlu0 %v306, 3
        %v315 = vpop.permute.xlu0 %314
        %s317 = scalar_lea.vmem [#allocation2], 16
        %318 = vst.msk [vmem:[%s317 + $0x3] sm:$0x1] %vm311, %v315
        %319 = vrot.lane.b32.xlu0 %v298, 115
        %v320 = vpop.permute.xlu0 %319
        %322 = vst.msk [vmem:[#allocation2 + $0x4] sm:$0x1] %vm311, %v320
        %323 = vrot.lane.b32.xlu0 %v306, 115
        %v324 = vpop.permute.xlu0 %323
        %326 = vst.msk [vmem:[%s317 + $0x4] sm:$0x1] %vm311, %v324
        %327 = vrot.lane.b32.xlu0 %v298, 99
        %v328 = vpop.permute.xlu0 %327
        %330 = vst.msk [vmem:[#allocation2 + $0x5] sm:$0x1] %vm311, %v328
        %331 = vrot.lane.b32.xlu0 %v306, 99
        %v332 = vpop.permute.xlu0 %331
        %334 = vst.msk [vmem:[%s317 + $0x5] sm:$0x1] %vm311, %v332
        %335 = vrot.lane.b32.xlu0 %v298, 83
        %v336 = vpop.permute.xlu0 %335
        %338 = vst.msk [vmem:[#allocation2 + $0x6] sm:$0x1] %vm311, %v336
        %339 = vrot.lane.b32.xlu0 %v306, 83
        %v340 = vpop.permute.xlu0 %339
        %342 = vst.msk [vmem:[%s317 + $0x6] sm:$0x1] %vm311, %v340
        %343 = vrot.lane.b32.xlu0 %v298, 67
        %v344 = vpop.permute.xlu0 %343
        %346 = vst.msk [vmem:[#allocation2 + $0x7] sm:$0x1] %vm311, %v344
        %347 = vrot.lane.b32.xlu0 %v306, 67
        %v348 = vpop.permute.xlu0 %347
        %350 = vst.msk [vmem:[%s317 + $0x7] sm:$0x1] %vm311, %v348
        %351 = vrot.lane.b32.xlu0 %v298, 51
        %v352 = vpop.permute.xlu0 %351
        %354 = vst.msk [vmem:[#allocation2 + $0x8] sm:$0x1] %vm311, %v352
        %355 = vrot.lane.b32.xlu0 %v306, 51
        %v356 = vpop.permute.xlu0 %355
        %358 = vst.msk [vmem:[%s317 + $0x8] sm:$0x1] %vm311, %v356
        %359 = vrot.lane.b32.xlu0 %v298, 35
        %v360 = vpop.permute.xlu0 %359
        %362 = vst.msk [vmem:[#allocation2 + $0x9] sm:$0x1] %vm311, %v360
        %363 = vrot.lane.b32.xlu0 %v306, 35
        %v364 = vpop.permute.xlu0 %363
        %366 = vst.msk [vmem:[%s317 + $0x9] sm:$0x1] %vm311, %v364
        %367 = vrot.lane.b32.xlu0 %v298, 19
        %v368 = vpop.permute.xlu0 %367
        %370 = vst.msk [vmem:[#allocation2 + $0xa] sm:$0x1] %vm311, %v368
        %371 = vrot.lane.b32.xlu0 %v306, 19
        %v372 = vpop.permute.xlu0 %371
        %374 = vst.msk [vmem:[%s317 + $0xa] sm:$0x1] %vm311, %v372
        %v375 = vld [vmem:[%s267] sm:$0x3f]
        %v376 = vld [vmem:[%s267 + $0x8] sm:$0x3f]
        %378 = vrot.lane.b32.xlu0 %v375, 3
        %v379 = vpop.permute.xlu0 %378
        %vm381 = vcmask 149528
        %382 = vst.msk [vmem:[#allocation2] sm:$0x7] %vm381, %v379
        %vm383 = vcmask 152603
        %384 = vst.msk [vmem:[#allocation2 + $0x8] sm:$0x38] %vm383, %v379
        %386 = vrot.lane.b32.xlu0 %v376, 3
        %v387 = vpop.permute.xlu0 %386
        %389 = vst.msk [vmem:[%s317] sm:$0x7] %vm381, %v387
        %390 = vst.msk [vmem:[%s317 + $0x8] sm:$0x38] %vm383, %v387
        %v391 = vld [vmem:[#allocation2] sm:$0xff]
        %v392 = vld [vmem:[#allocation2 + $0x8] sm:$0x3f]
        %s393 = sld [smem:[#allocation5]]
        %v394 = vstv %s393
        %v395 = vmul.f32 %v394, %v391
        %v396 = vadd.f32 %v395, 0.0
        %s397 = sld [smem:[#allocation5 + $0x7]]
        %v398 = vstv %s397
        %v399 = vmul.f32 %v398, %v391
        %v400 = vmul.f32 %v398, %v392
        %v401 = vadd.f32 %v399, 0.0
        %v402 = vadd.f32 %v400, 0.0
        %s403 = sld [smem:[#allocation5 + $0xe]]
        %v404 = vstv %s403
        %v405 = vmul.f32 %v404, %v391
        %v406 = vmul.f32 %v404, %v392
        %v407 = vadd.f32 %v405, 0.0
        %v408 = vadd.f32 %v406, 0.0
        %s409 = sld [smem:[#allocation5 + $0x15]]
        %v410 = vstv %s409
        %v411 = vmul.f32 %v410, %v391
        %v412 = vmul.f32 %v410, %v392
        %v413 = vadd.f32 %v411, 0.0
        %v414 = vadd.f32 %v412, 0.0
        %s415 = sld [smem:[#allocation5 + $0x1c]]
        %v416 = vstv %s415
        %v417 = vmul.f32 %v416, %v391
        %v418 = vmul.f32 %v416, %v392
        %v421 = vrot.slane %v417, 4
        %v422 = vrot.slane %v418, 4
        %v423 = vsel %vm291, %v421, %v422
        %v425 = vadd.f32 %v396, %v423
        %s426 = sld [smem:[#allocation5 + $0x23]]
        %v427 = vstv %s426
        %v428 = vmul.f32 %v427, %v391
        %v429 = vmul.f32 %v427, %v392
        %v432 = vrot.slane %v428, 4
        %v433 = vrot.slane %v429, 4
        %v434 = vsel %vm291, %v432, %v433
        %v437 = vadd.f32 %v401, %v434
        %v438 = vadd.f32 %v402, %v433
        %s439 = sld [smem:[#allocation5 + $0x2a]]
        %v440 = vstv %s439
        %v441 = vmul.f32 %v440, %v391
        %v442 = vmul.f32 %v440, %v392
        %v445 = vrot.slane %v441, 4
        %v446 = vrot.slane %v442, 4
        %v447 = vsel %vm291, %v445, %v446
        %v450 = vadd.f32 %v407, %v447
        %v451 = vadd.f32 %v408, %v446
        %s452 = sld [smem:[#allocation5 + $0x1]]
        %v453 = vstv %s452
        %v454 = vmul.f32 %v453, %v391
        %v456 = vrot.slane %v454, 5
        %457 = vrot.lane.b32.xlu0 %v456, 127
        %v458 = vpop.permute.xlu0 %457
        %v460 = vadd.f32 %v413, %v458
        %v461 = vadd.f32 %v414, %v458
        %s462 = sld [smem:[#allocation5 + $0x8]]
        %v463 = vstv %s462
        %v464 = vmul.f32 %v463, %v391
        %v465 = vmul.f32 %v463, %v392
        %vm468 = vcmask 1046528
        %v469 = vrot.slane %v464, 1
        %v470 = vrot.slane %v465, 1
        %v471 = vsel %vm468, %v469, %v470
        %472 = vrot.lane.b32.xlu0 %v471, 127
        %v473 = vpop.permute.xlu0 %472
        %v475 = vadd.f32 %v425, %v473
        %s476 = sld [smem:[#allocation5 + $0xf]]
        %v477 = vstv %s476
        %v478 = vmul.f32 %v477, %v391
        %v479 = vmul.f32 %v477, %v392
        %v482 = vrot.slane %v478, 1
        %v483 = vrot.slane %v479, 1
        %v484 = vsel %vm468, %v482, %v483
        %485 = vrot.lane.b32.xlu0 %v484, 127
        %v486 = vpop.permute.xlu0 %485
        %487 = vrot.lane.b32.xlu0 %v483, 127
        %v488 = vpop.permute.xlu0 %487
        %v491 = vadd.f32 %v437, %v486
        %v492 = vadd.f32 %v438, %v488
        %s493 = sld [smem:[#allocation5 + $0x16]]
        %v494 = vstv %s493
        %v495 = vmul.f32 %v494, %v391
        %v496 = vmul.f32 %v494, %v392
        %v499 = vrot.slane %v495, 1
        %v500 = vrot.slane %v496, 1
        %v501 = vsel %vm468, %v499, %v500
        %502 = vrot.lane.b32.xlu0 %v501, 127
        %v503 = vpop.permute.xlu0 %502
        %504 = vrot.lane.b32.xlu0 %v500, 127
        %v505 = vpop.permute.xlu0 %504
        %v508 = vadd.f32 %v450, %v503
        %v509 = vadd.f32 %v451, %v505
        %s510 = sld [smem:[#allocation5 + $0x1d]]
        %v511 = vstv %s510
        %v512 = vmul.f32 %v511, %v391
        %v513 = vmul.f32 %v511, %v392
        %v516 = vrot.slane %v512, 1
        %v517 = vrot.slane %v513, 1
        %v518 = vsel %vm468, %v516, %v517
        %519 = vrot.lane.b32.xlu0 %v518, 127
        %v520 = vpop.permute.xlu0 %519
        %521 = vrot.lane.b32.xlu0 %v517, 127
        %v522 = vpop.permute.xlu0 %521
        %v525 = vadd.f32 %v460, %v520
        %v526 = vadd.f32 %v461, %v522
        %s527 = sld [smem:[#allocation5 + $0x24]]
        %v528 = vstv %s527
        %v529 = vmul.f32 %v528, %v391
        %v530 = vmul.f32 %v528, %v392
        %vm533 = vcmask 1042432
        %v534 = vrot.slane %v529, 5
        %v535 = vrot.slane %v530, 5
        %v536 = vsel %vm533, %v534, %v535
        %537 = vrot.lane.b32.xlu0 %v536, 127
        %v538 = vpop.permute.xlu0 %537
        %v540 = vadd.f32 %v475, %v538
        %s541 = sld [smem:[#allocation5 + $0x2b]]
        %v542 = vstv %s541
        %v543 = vmul.f32 %v542, %v391
        %v544 = vmul.f32 %v542, %v392
        %v547 = vrot.slane %v543, 5
        %v548 = vrot.slane %v544, 5
        %v549 = vsel %vm533, %v547, %v548
        %550 = vrot.lane.b32.xlu0 %v549, 127
        %v551 = vpop.permute.xlu0 %550
        %552 = vrot.lane.b32.xlu0 %v548, 127
        %v553 = vpop.permute.xlu0 %552
        %v556 = vadd.f32 %v491, %v551
        %v557 = vadd.f32 %v492, %v553
        %s558 = sld [smem:[#allocation5 + $0x2]]
        %v559 = vstv %s558
        %v560 = vmul.f32 %v559, %v391
        %v562 = vrot.slane %v560, 6
        %563 = vrot.lane.b32.xlu0 %v562, 126
        %v564 = vpop.permute.xlu0 %563
        %v566 = vadd.f32 %v508, %v564
        %v567 = vadd.f32 %v509, %v564
        %s568 = sld [smem:[#allocation5 + $0x9]]
        %v569 = vstv %s568
        %v570 = vmul.f32 %v569, %v391
        %v571 = vmul.f32 %v569, %v392
        %vm574 = vcmask 1041408
        %v575 = vrot.slane %v570, 6
        %v576 = vrot.slane %v571, 6
        %v577 = vsel %vm574, %v575, %v576
        %578 = vrot.lane.b32.xlu0 %v575, 126
        %v579 = vpop.permute.xlu0 %578
        %580 = vrot.lane.b32.xlu0 %v577, 126
        %v581 = vpop.permute.xlu0 %580
        %v584 = vadd.f32 %v525, %v579
        %v585 = vadd.f32 %v526, %v581
        %s586 = sld [smem:[#allocation5 + $0x10]]
        %v587 = vstv %s586
        %v588 = vmul.f32 %v587, %v391
        %v589 = vmul.f32 %v587, %v392
        %vm592 = vcmask 1045504
        %v593 = vrot.slane %v588, 2
        %v594 = vrot.slane %v589, 2
        %v595 = vsel %vm592, %v593, %v594
        %596 = vrot.lane.b32.xlu0 %v595, 126
        %v597 = vpop.permute.xlu0 %596
        %v599 = vadd.f32 %v540, %v597
        %s600 = sld [smem:[#allocation5 + $0x17]]
        %v601 = vstv %s600
        %v602 = vmul.f32 %v601, %v391
        %v603 = vmul.f32 %v601, %v392
        %v606 = vrot.slane %v602, 2
        %v607 = vrot.slane %v603, 2
        %v608 = vsel %vm592, %v606, %v607
        %609 = vrot.lane.b32.xlu0 %v608, 126
        %v610 = vpop.permute.xlu0 %609
        %611 = vrot.lane.b32.xlu0 %v607, 126
        %v612 = vpop.permute.xlu0 %611
        %v615 = vadd.f32 %v556, %v610
        %v616 = vadd.f32 %v557, %v612
        %s617 = sld [smem:[#allocation5 + $0x1e]]
        %v618 = vstv %s617
        %v619 = vmul.f32 %v618, %v391
        %v620 = vmul.f32 %v618, %v392
        %v623 = vrot.slane %v619, 2
        %v624 = vrot.slane %v620, 2
        %v625 = vsel %vm592, %v623, %v624
        %626 = vrot.lane.b32.xlu0 %v625, 126
        %v627 = vpop.permute.xlu0 %626
        %628 = vrot.lane.b32.xlu0 %v624, 126
        %v629 = vpop.permute.xlu0 %628
        %v632 = vadd.f32 %v566, %v627
        %v633 = vadd.f32 %v567, %v629
        %s634 = sld [smem:[#allocation5 + $0x25]]
        %v635 = vstv %s634
        %v636 = vmul.f32 %v635, %v391
        %v637 = vmul.f32 %v635, %v392
        %v640 = vrot.slane %v636, 2
        %v641 = vrot.slane %v637, 2
        %v642 = vsel %vm592, %v640, %v641
        %643 = vrot.lane.b32.xlu0 %v642, 126
        %v644 = vpop.permute.xlu0 %643
        %645 = vrot.lane.b32.xlu0 %v641, 126
        %v646 = vpop.permute.xlu0 %645
        %v649 = vadd.f32 %v584, %v644
        %v650 = vadd.f32 %v585, %v646
        %s651 = sld [smem:[#allocation5 + $0x2c]]
        %v652 = vstv %s651
        %v653 = vmul.f32 %v652, %v391
        %v654 = vmul.f32 %v652, %v392
        %v657 = vrot.slane %v653, 6
        %v658 = vrot.slane %v654, 6
        %v659 = vsel %vm574, %v657, %v658
        %660 = vrot.lane.b32.xlu0 %v659, 126
        %v661 = vpop.permute.xlu0 %660
        %v663 = vadd.f32 %v599, %v661
        %s664 = sld [smem:[#allocation5 + $0x3]]
        %v665 = vstv %s664
        %v666 = vmul.f32 %v665, %v391
        %v668 = vrot.slane %v666, 7
        %669 = vrot.lane.b32.xlu0 %v668, 125
        %v670 = vpop.permute.xlu0 %669
        %v672 = vadd.f32 %v615, %v670
        %v673 = vadd.f32 %v616, %v670
        %s674 = sld [smem:[#allocation5 + $0xa]]
        %v675 = vstv %s674
        %v676 = vmul.f32 %v675, %v391
        %v677 = vmul.f32 %v675, %v392
        %vm680 = vcmask 1040384
        %v681 = vrot.slane %v676, 7
        %v682 = vrot.slane %v677, 7
        %v683 = vsel %vm680, %v681, %v682
        %684 = vrot.lane.b32.xlu0 %v681, 125
        %v685 = vpop.permute.xlu0 %684
        %686 = vrot.lane.b32.xlu0 %v683, 125
        %v687 = vpop.permute.xlu0 %686
        %v690 = vadd.f32 %v632, %v685
        %v691 = vadd.f32 %v633, %v687
        %s692 = sld [smem:[#allocation5 + $0x11]]
        %v693 = vstv %s692
        %v694 = vmul.f32 %v693, %v391
        %v695 = vmul.f32 %v693, %v392
        %v698 = vrot.slane %v694, 7
        %v699 = vrot.slane %v695, 7
        %v700 = vsel %vm680, %v698, %v699
        %701 = vrot.lane.b32.xlu0 %v698, 125
        %v702 = vpop.permute.xlu0 %701
        %703 = vrot.lane.b32.xlu0 %v700, 125
        %v704 = vpop.permute.xlu0 %703
        %v707 = vadd.f32 %v649, %v702
        %v708 = vadd.f32 %v650, %v704
        %s709 = sld [smem:[#allocation5 + $0x18]]
        %v710 = vstv %s709
        %v711 = vmul.f32 %v710, %v391
        %v712 = vmul.f32 %v710, %v392
        %vm715 = vcmask 1044480
        %v716 = vrot.slane %v711, 3
        %v717 = vrot.slane %v712, 3
        %v718 = vsel %vm715, %v716, %v717
        %719 = vrot.lane.b32.xlu0 %v718, 125
        %v720 = vpop.permute.xlu0 %719
        %v722 = vadd.f32 %v663, %v720
        %s723 = sld [smem:[#allocation5 + $0x1f]]
        %v724 = vstv %s723
        %v725 = vmul.f32 %v724, %v391
        %v726 = vmul.f32 %v724, %v392
        %v729 = vrot.slane %v725, 3
        %v730 = vrot.slane %v726, 3
        %v731 = vsel %vm715, %v729, %v730
        %732 = vrot.lane.b32.xlu0 %v731, 125
        %v733 = vpop.permute.xlu0 %732
        %734 = vrot.lane.b32.xlu0 %v730, 125
        %v735 = vpop.permute.xlu0 %734
        %v738 = vadd.f32 %v672, %v733
        %v739 = vadd.f32 %v673, %v735
        %s740 = sld [smem:[#allocation5 + $0x26]]
        %v741 = vstv %s740
        %v742 = vmul.f32 %v741, %v391
        %v743 = vmul.f32 %v741, %v392
        %v746 = vrot.slane %v742, 3
        %v747 = vrot.slane %v743, 3
        %v748 = vsel %vm715, %v746, %v747
        %749 = vrot.lane.b32.xlu0 %v748, 125
        %v750 = vpop.permute.xlu0 %749
        %751 = vrot.lane.b32.xlu0 %v747, 125
        %v752 = vpop.permute.xlu0 %751
        %v755 = vadd.f32 %v690, %v750
        %v756 = vadd.f32 %v691, %v752
        %s757 = sld [smem:[#allocation5 + $0x2d]]
        %v758 = vstv %s757
        %v759 = vmul.f32 %v758, %v391
        %v760 = vmul.f32 %v758, %v392
        %v763 = vrot.slane %v759, 3
        %v764 = vrot.slane %v760, 3
        %v765 = vsel %vm715, %v763, %v764
        %766 = vrot.lane.b32.xlu0 %v765, 125
        %v767 = vpop.permute.xlu0 %766
        %768 = vrot.lane.b32.xlu0 %v764, 125
        %v769 = vpop.permute.xlu0 %768
        %v772 = vadd.f32 %v707, %v767
        %v773 = vadd.f32 %v708, %v769
        %s774 = sld [smem:[#allocation5 + $0x4]]
        %v775 = vstv %s774
        %v776 = vmul.f32 %v775, %v391
        %778 = vrot.lane.b32.xlu0 %v776, 124
        %v779 = vpop.permute.xlu0 %778
        %v781 = vadd.f32 %v722, %v779
        %s782 = sld [smem:[#allocation5 + $0xb]]
        %v783 = vstv %s782
        %v784 = vmul.f32 %v783, %v391
        %v785 = vmul.f32 %v783, %v392
        %788 = vrot.lane.b32.xlu0 %v784, 124
        %v789 = vpop.permute.xlu0 %788
        %790 = vrot.lane.b32.xlu0 %v785, 124
        %v791 = vpop.permute.xlu0 %790
        %v794 = vadd.f32 %v738, %v789
        %v795 = vadd.f32 %v739, %v791
        %s796 = sld [smem:[#allocation5 + $0x12]]
        %v797 = vstv %s796
        %v798 = vmul.f32 %v797, %v391
        %v799 = vmul.f32 %v797, %v392
        %802 = vrot.lane.b32.xlu0 %v798, 124
        %v803 = vpop.permute.xlu0 %802
        %804 = vrot.lane.b32.xlu0 %v799, 124
        %v805 = vpop.permute.xlu0 %804
        %v808 = vadd.f32 %v755, %v803
        %v809 = vadd.f32 %v756, %v805
        %s810 = sld [smem:[#allocation5 + $0x19]]
        %v811 = vstv %s810
        %v812 = vmul.f32 %v811, %v391
        %v813 = vmul.f32 %v811, %v392
        %816 = vrot.lane.b32.xlu0 %v812, 124
        %v817 = vpop.permute.xlu0 %816
        %818 = vrot.lane.b32.xlu0 %v813, 124
        %v819 = vpop.permute.xlu0 %818
        %v822 = vadd.f32 %v772, %v817
        %v823 = vadd.f32 %v773, %v819
        %s824 = sld [smem:[#allocation5 + $0x20]]
        %v825 = vstv %s824
        %v826 = vmul.f32 %v825, %v391
        %v827 = vmul.f32 %v825, %v392
        %v830 = vrot.slane %v826, 4
        %v831 = vrot.slane %v827, 4
        %v832 = vsel %vm291, %v830, %v831
        %833 = vrot.lane.b32.xlu0 %v832, 124
        %v834 = vpop.permute.xlu0 %833
        %v836 = vadd.f32 %v781, %v834
        %s837 = sld [smem:[#allocation5 + $0x27]]
        %v838 = vstv %s837
        %v839 = vmul.f32 %v838, %v391
        %v840 = vmul.f32 %v838, %v392
        %v843 = vrot.slane %v839, 4
        %v844 = vrot.slane %v840, 4
        %v845 = vsel %vm291, %v843, %v844
        %846 = vrot.lane.b32.xlu0 %v845, 124
        %v847 = vpop.permute.xlu0 %846
        %848 = vrot.lane.b32.xlu0 %v844, 124
        %v849 = vpop.permute.xlu0 %848
        %v852 = vadd.f32 %v794, %v847
        %v853 = vadd.f32 %v795, %v849
        %s854 = sld [smem:[#allocation5 + $0x2e]]
        %v855 = vstv %s854
        %v856 = vmul.f32 %v855, %v391
        %v857 = vmul.f32 %v855, %v392
        %v860 = vrot.slane %v856, 4
        %v861 = vrot.slane %v857, 4
        %v862 = vsel %vm291, %v860, %v861
        %863 = vrot.lane.b32.xlu0 %v862, 124
        %v864 = vpop.permute.xlu0 %863
        %865 = vrot.lane.b32.xlu0 %v861, 124
        %v866 = vpop.permute.xlu0 %865
        %v869 = vadd.f32 %v808, %v864
        %v870 = vadd.f32 %v809, %v866
        %s871 = sld [smem:[#allocation5 + $0x5]]
        %v872 = vstv %s871
        %v873 = vmul.f32 %v872, %v391
        %v875 = vrot.slane %v873, 5
        %876 = vrot.lane.b32.xlu0 %v875, 123
        %v877 = vpop.permute.xlu0 %876
        %v879 = vadd.f32 %v822, %v877
        %v880 = vadd.f32 %v823, %v877
        %s881 = sld [smem:[#allocation5 + $0xc]]
        %v882 = vstv %s881
        %v883 = vmul.f32 %v882, %v391
        %v884 = vmul.f32 %v882, %v392
        %v887 = vrot.slane %v883, 1
        %v888 = vrot.slane %v884, 1
        %v889 = vsel %vm468, %v887, %v888
        %890 = vrot.lane.b32.xlu0 %v889, 123
        %v891 = vpop.permute.xlu0 %890
        %v893 = vadd.f32 %v836, %v891
        %s894 = sld [smem:[#allocation5 + $0x13]]
        %v895 = vstv %s894
        %v896 = vmul.f32 %v895, %v391
        %v897 = vmul.f32 %v895, %v392
        %v900 = vrot.slane %v896, 1
        %v901 = vrot.slane %v897, 1
        %v902 = vsel %vm468, %v900, %v901
        %903 = vrot.lane.b32.xlu0 %v902, 123
        %v904 = vpop.permute.xlu0 %903
        %905 = vrot.lane.b32.xlu0 %v901, 123
        %v906 = vpop.permute.xlu0 %905
        %v909 = vadd.f32 %v852, %v904
        %v910 = vadd.f32 %v853, %v906
        %s911 = sld [smem:[#allocation5 + $0x1a]]
        %v912 = vstv %s911
        %v913 = vmul.f32 %v912, %v391
        %v914 = vmul.f32 %v912, %v392
        %v917 = vrot.slane %v913, 1
        %v918 = vrot.slane %v914, 1
        %v919 = vsel %vm468, %v917, %v918
        %920 = vrot.lane.b32.xlu0 %v919, 123
        %v921 = vpop.permute.xlu0 %920
        %922 = vrot.lane.b32.xlu0 %v918, 123
        %v923 = vpop.permute.xlu0 %922
        %v926 = vadd.f32 %v869, %v921
        %v927 = vadd.f32 %v870, %v923
        %s928 = sld [smem:[#allocation5 + $0x21]]
        %v929 = vstv %s928
        %v930 = vmul.f32 %v929, %v391
        %v931 = vmul.f32 %v929, %v392
        %v934 = vrot.slane %v930, 1
        %v935 = vrot.slane %v931, 1
        %v936 = vsel %vm468, %v934, %v935
        %937 = vrot.lane.b32.xlu0 %v936, 123
        %v938 = vpop.permute.xlu0 %937
        %939 = vrot.lane.b32.xlu0 %v935, 123
        %v940 = vpop.permute.xlu0 %939
        %v943 = vadd.f32 %v879, %v938
        %v944 = vadd.f32 %v880, %v940
        %s945 = sld [smem:[#allocation5 + $0x28]]
        %v946 = vstv %s945
        %v947 = vmul.f32 %v946, %v391
        %v948 = vmul.f32 %v946, %v392
        %v951 = vrot.slane %v947, 5
        %v952 = vrot.slane %v948, 5
        %v953 = vsel %vm533, %v951, %v952
        %954 = vrot.lane.b32.xlu0 %v953, 123
        %v955 = vpop.permute.xlu0 %954
        %v957 = vadd.f32 %v893, %v955
        %s958 = sld [smem:[#allocation5 + $0x2f]]
        %v959 = vstv %s958
        %v960 = vmul.f32 %v959, %v391
        %v961 = vmul.f32 %v959, %v392
        %v964 = vrot.slane %v960, 5
        %v965 = vrot.slane %v961, 5
        %v966 = vsel %vm533, %v964, %v965
        %967 = vrot.lane.b32.xlu0 %v966, 123
        %v968 = vpop.permute.xlu0 %967
        %969 = vrot.lane.b32.xlu0 %v965, 123
        %v970 = vpop.permute.xlu0 %969
        %v973 = vadd.f32 %v909, %v968
        %v974 = vadd.f32 %v910, %v970
        %s975 = sld [smem:[#allocation5 + $0x6]]
        %v976 = vstv %s975
        %v977 = vmul.f32 %v976, %v391
        %v979 = vrot.slane %v977, 6
        %980 = vrot.lane.b32.xlu0 %v979, 122
        %v981 = vpop.permute.xlu0 %980
        %v983 = vadd.f32 %v926, %v981
        %v984 = vadd.f32 %v927, %v981
        %s985 = sld [smem:[#allocation5 + $0xd]]
        %v986 = vstv %s985
        %v987 = vmul.f32 %v986, %v391
        %v988 = vmul.f32 %v986, %v392
        %v991 = vrot.slane %v987, 6
        %v992 = vrot.slane %v988, 6
        %v993 = vsel %vm574, %v991, %v992
        %994 = vrot.lane.b32.xlu0 %v991, 122
        %v995 = vpop.permute.xlu0 %994
        %996 = vrot.lane.b32.xlu0 %v993, 122
        %v997 = vpop.permute.xlu0 %996
        %v1000 = vadd.f32 %v943, %v995
        %v1001 = vadd.f32 %v944, %v997
        %s1002 = sld [smem:[#allocation5 + $0x14]]
        %v1003 = vstv %s1002
        %v1004 = vmul.f32 %v1003, %v391
        %v1005 = vmul.f32 %v1003, %v392
        %v1008 = vrot.slane %v1004, 2
        %v1009 = vrot.slane %v1005, 2
        %v1010 = vsel %vm592, %v1008, %v1009
        %1011 = vrot.lane.b32.xlu0 %v1010, 122
        %v1012 = vpop.permute.xlu0 %1011
        %v1014 = vadd.f32 %v957, %v1012
        %s1015 = sld [smem:[#allocation5 + $0x1b]]
        %v1016 = vstv %s1015
        %v1017 = vmul.f32 %v1016, %v391
        %v1018 = vmul.f32 %v1016, %v392
        %v1021 = vrot.slane %v1017, 2
        %v1022 = vrot.slane %v1018, 2
        %v1023 = vsel %vm592, %v1021, %v1022
        %1024 = vrot.lane.b32.xlu0 %v1023, 122
        %v1025 = vpop.permute.xlu0 %1024
        %1026 = vrot.lane.b32.xlu0 %v1022, 122
        %v1027 = vpop.permute.xlu0 %1026
        %v1030 = vadd.f32 %v973, %v1025
        %v1031 = vadd.f32 %v974, %v1027
        %s1032 = sld [smem:[#allocation5 + $0x22]]
        %v1033 = vstv %s1032
        %v1034 = vmul.f32 %v1033, %v391
        %v1035 = vmul.f32 %v1033, %v392
        %v1038 = vrot.slane %v1034, 2
        %v1039 = vrot.slane %v1035, 2
        %v1040 = vsel %vm592, %v1038, %v1039
        %1041 = vrot.lane.b32.xlu0 %v1040, 122
        %v1042 = vpop.permute.xlu0 %1041
        %1043 = vrot.lane.b32.xlu0 %v1039, 122
        %v1044 = vpop.permute.xlu0 %1043
        %v1047 = vadd.f32 %v983, %v1042
        %v1048 = vadd.f32 %v984, %v1044
        %s1049 = sld [smem:[#allocation5 + $0x29]]
        %v1050 = vstv %s1049
        %v1051 = vmul.f32 %v1050, %v391
        %v1052 = vmul.f32 %v1050, %v392
        %v1055 = vrot.slane %v1051, 2
        %v1056 = vrot.slane %v1052, 2
        %v1057 = vsel %vm592, %v1055, %v1056
        %1058 = vrot.lane.b32.xlu0 %v1057, 122
        %v1059 = vpop.permute.xlu0 %1058
        %1060 = vrot.lane.b32.xlu0 %v1056, 122
        %v1061 = vpop.permute.xlu0 %1060
        %v1064 = vadd.f32 %v1000, %v1059
        %v1065 = vadd.f32 %v1001, %v1061
        %s1066 = sld [smem:[#allocation5 + $0x30]]
        %v1067 = vstv %s1066
        %v1068 = vmul.f32 %v1067, %v391
        %v1069 = vmul.f32 %v1067, %v392
        %v1072 = vrot.slane %v1068, 6
        %v1073 = vrot.slane %v1069, 6
        %v1074 = vsel %vm574, %v1072, %v1073
        %1075 = vrot.lane.b32.xlu0 %v1074, 122
        %v1076 = vpop.permute.xlu0 %1075
        %v1078 = vadd.f32 %v1014, %v1076
        %v1079 = vld [vmem:[%s317] sm:$0xff]
        %v1080 = vld [vmem:[%s317 + $0x8] sm:$0x3f]
        %s1081 = sld [smem:[#allocation5 + $0x31]]
        %v1082 = vstv %s1081
        %v1083 = vmul.f32 %v1082, %v1079
        %v1085 = vrot.slane %v1083, 7
        %v1087 = vadd.f32 %v1030, %v1085
        %v1088 = vadd.f32 %v1031, %v1085
        %s1089 = sld [smem:[#allocation5 + $0x38]]
        %v1090 = vstv %s1089
        %v1091 = vmul.f32 %v1090, %v1079
        %v1092 = vmul.f32 %v1090, %v1080
        %v1095 = vrot.slane %v1091, 7
        %v1096 = vrot.slane %v1092, 7
        %v1097 = vsel %vm680, %v1095, %v1096
        %v1100 = vadd.f32 %v1047, %v1095
        %v1101 = vadd.f32 %v1048, %v1097
        %s1102 = sld [smem:[#allocation5 + $0x3f]]
        %v1103 = vstv %s1102
        %v1104 = vmul.f32 %v1103, %v1079
        %v1105 = vmul.f32 %v1103, %v1080
        %v1108 = vrot.slane %v1104, 7
        %v1109 = vrot.slane %v1105, 7
        %v1110 = vsel %vm680, %v1108, %v1109
        %v1113 = vadd.f32 %v1064, %v1108
        %v1114 = vadd.f32 %v1065, %v1110
        %s1115 = sld [smem:[#allocation5 + $0x46]]
        %v1116 = vstv %s1115
        %v1117 = vmul.f32 %v1116, %v1079
        %v1118 = vmul.f32 %v1116, %v1080
        %v1121 = vrot.slane %v1117, 3
        %v1122 = vrot.slane %v1118, 3
        %v1123 = vsel %vm715, %v1121, %v1122
        %v1125 = vadd.f32 %v1078, %v1123
        %s1126 = sld [smem:[#allocation5 + $0x4d]]
        %v1127 = vstv %s1126
        %v1128 = vmul.f32 %v1127, %v1079
        %v1129 = vmul.f32 %v1127, %v1080
        %v1132 = vrot.slane %v1128, 3
        %v1133 = vrot.slane %v1129, 3
        %v1134 = vsel %vm715, %v1132, %v1133
        %v1137 = vadd.f32 %v1087, %v1134
        %v1138 = vadd.f32 %v1088, %v1133
        %s1139 = sld [smem:[#allocation5 + $0x54]]
        %v1140 = vstv %s1139
        %v1141 = vmul.f32 %v1140, %v1079
        %v1142 = vmul.f32 %v1140, %v1080
        %v1145 = vrot.slane %v1141, 3
        %v1146 = vrot.slane %v1142, 3
        %v1147 = vsel %vm715, %v1145, %v1146
        %v1150 = vadd.f32 %v1100, %v1147
        %v1151 = vadd.f32 %v1101, %v1146
        %s1152 = sld [smem:[#allocation5 + $0x5b]]
        %v1153 = vstv %s1152
        %v1154 = vmul.f32 %v1153, %v1079
        %v1155 = vmul.f32 %v1153, %v1080
        %v1158 = vrot.slane %v1154, 3
        %v1159 = vrot.slane %v1155, 3
        %v1160 = vsel %vm715, %v1158, %v1159
        %v1163 = vadd.f32 %v1113, %v1160
        %v1164 = vadd.f32 %v1114, %v1159
        %s1165 = sld [smem:[#allocation5 + $0x32]]
        %v1166 = vstv %s1165
        %v1167 = vmul.f32 %v1166, %v1079
        %1169 = vrot.lane.b32.xlu0 %v1167, 127
        %v1170 = vpop.permute.xlu0 %1169
        %v1172 = vadd.f32 %v1125, %v1170
        %s1173 = sld [smem:[#allocation5 + $0x39]]
        %v1174 = vstv %s1173
        %v1175 = vmul.f32 %v1174, %v1079
        %v1176 = vmul.f32 %v1174, %v1080
        %1179 = vrot.lane.b32.xlu0 %v1175, 127
        %v1180 = vpop.permute.xlu0 %1179
        %1181 = vrot.lane.b32.xlu0 %v1176, 127
        %v1182 = vpop.permute.xlu0 %1181
        %v1185 = vadd.f32 %v1137, %v1180
        %v1186 = vadd.f32 %v1138, %v1182
        %s1187 = sld [smem:[#allocation5 + $0x40]]
        %v1188 = vstv %s1187
        %v1189 = vmul.f32 %v1188, %v1079
        %v1190 = vmul.f32 %v1188, %v1080
        %1193 = vrot.lane.b32.xlu0 %v1189, 127
        %v1194 = vpop.permute.xlu0 %1193
        %1195 = vrot.lane.b32.xlu0 %v1190, 127
        %v1196 = vpop.permute.xlu0 %1195
        %v1199 = vadd.f32 %v1150, %v1194
        %v1200 = vadd.f32 %v1151, %v1196
        %s1201 = sld [smem:[#allocation5 + $0x47]]
        %v1202 = vstv %s1201
        %v1203 = vmul.f32 %v1202, %v1079
        %v1204 = vmul.f32 %v1202, %v1080
        %1207 = vrot.lane.b32.xlu0 %v1203, 127
        %v1208 = vpop.permute.xlu0 %1207
        %1209 = vrot.lane.b32.xlu0 %v1204, 127
        %v1210 = vpop.permute.xlu0 %1209
        %v1213 = vadd.f32 %v1163, %v1208
        %v1214 = vadd.f32 %v1164, %v1210
        %s1215 = sld [smem:[#allocation5 + $0x4e]]
        %v1216 = vstv %s1215
        %v1217 = vmul.f32 %v1216, %v1079
        %v1218 = vmul.f32 %v1216, %v1080
        %v1221 = vrot.slane %v1217, 4
        %v1222 = vrot.slane %v1218, 4
        %v1223 = vsel %vm291, %v1221, %v1222
        %1224 = vrot.lane.b32.xlu0 %v1223, 127
        %v1225 = vpop.permute.xlu0 %1224
        %v1227 = vadd.f32 %v1172, %v1225
        %s1228 = sld [smem:[#allocation5 + $0x55]]
        %v1229 = vstv %s1228
        %v1230 = vmul.f32 %v1229, %v1079
        %v1231 = vmul.f32 %v1229, %v1080
        %v1234 = vrot.slane %v1230, 4
        %v1235 = vrot.slane %v1231, 4
        %v1236 = vsel %vm291, %v1234, %v1235
        %1237 = vrot.lane.b32.xlu0 %v1236, 127
        %v1238 = vpop.permute.xlu0 %1237
        %1239 = vrot.lane.b32.xlu0 %v1235, 127
        %v1240 = vpop.permute.xlu0 %1239
        %v1243 = vadd.f32 %v1185, %v1238
        %v1244 = vadd.f32 %v1186, %v1240
        %s1245 = sld [smem:[#allocation5 + $0x5c]]
        %v1246 = vstv %s1245
        %v1247 = vmul.f32 %v1246, %v1079
        %v1248 = vmul.f32 %v1246, %v1080
        %v1251 = vrot.slane %v1247, 4
        %v1252 = vrot.slane %v1248, 4
        %v1253 = vsel %vm291, %v1251, %v1252
        %1254 = vrot.lane.b32.xlu0 %v1253, 127
        %v1255 = vpop.permute.xlu0 %1254
        %1256 = vrot.lane.b32.xlu0 %v1252, 127
        %v1257 = vpop.permute.xlu0 %1256
        %v1260 = vadd.f32 %v1199, %v1255
        %v1261 = vadd.f32 %v1200, %v1257
        %s1262 = sld [smem:[#allocation5 + $0x33]]
        %v1263 = vstv %s1262
        %v1264 = vmul.f32 %v1263, %v1079
        %v1266 = vrot.slane %v1264, 5
        %1267 = vrot.lane.b32.xlu0 %v1266, 126
        %v1268 = vpop.permute.xlu0 %1267
        %v1270 = vadd.f32 %v1213, %v1268
        %v1271 = vadd.f32 %v1214, %v1268
        %s1272 = sld [smem:[#allocation5 + $0x3a]]
        %v1273 = vstv %s1272
        %v1274 = vmul.f32 %v1273, %v1079
        %v1275 = vmul.f32 %v1273, %v1080
        %v1278 = vrot.slane %v1274, 1
        %v1279 = vrot.slane %v1275, 1
        %v1280 = vsel %vm468, %v1278, %v1279
        %1281 = vrot.lane.b32.xlu0 %v1280, 126
        %v1282 = vpop.permute.xlu0 %1281
        %v1284 = vadd.f32 %v1227, %v1282
        %s1285 = sld [smem:[#allocation5 + $0x41]]
        %v1286 = vstv %s1285
        %v1287 = vmul.f32 %v1286, %v1079
        %v1288 = vmul.f32 %v1286, %v1080
        %v1291 = vrot.slane %v1287, 1
        %v1292 = vrot.slane %v1288, 1
        %v1293 = vsel %vm468, %v1291, %v1292
        %1294 = vrot.lane.b32.xlu0 %v1293, 126
        %v1295 = vpop.permute.xlu0 %1294
        %1296 = vrot.lane.b32.xlu0 %v1292, 126
        %v1297 = vpop.permute.xlu0 %1296
        %v1300 = vadd.f32 %v1243, %v1295
        %v1301 = vadd.f32 %v1244, %v1297
        %s1302 = sld [smem:[#allocation5 + $0x48]]
        %v1303 = vstv %s1302
        %v1304 = vmul.f32 %v1303, %v1079
        %v1305 = vmul.f32 %v1303, %v1080
        %v1308 = vrot.slane %v1304, 1
        %v1309 = vrot.slane %v1305, 1
        %v1310 = vsel %vm468, %v1308, %v1309
        %1311 = vrot.lane.b32.xlu0 %v1310, 126
        %v1312 = vpop.permute.xlu0 %1311
        %1313 = vrot.lane.b32.xlu0 %v1309, 126
        %v1314 = vpop.permute.xlu0 %1313
        %v1317 = vadd.f32 %v1260, %v1312
        %v1318 = vadd.f32 %v1261, %v1314
        %s1319 = sld [smem:[#allocation5 + $0x4f]]
        %v1320 = vstv %s1319
        %v1321 = vmul.f32 %v1320, %v1079
        %v1322 = vmul.f32 %v1320, %v1080
        %v1325 = vrot.slane %v1321, 1
        %v1326 = vrot.slane %v1322, 1
        %v1327 = vsel %vm468, %v1325, %v1326
        %1328 = vrot.lane.b32.xlu0 %v1327, 126
        %v1329 = vpop.permute.xlu0 %1328
        %1330 = vrot.lane.b32.xlu0 %v1326, 126
        %v1331 = vpop.permute.xlu0 %1330
        %v1334 = vadd.f32 %v1270, %v1329
        %v1335 = vadd.f32 %v1271, %v1331
        %s1336 = sld [smem:[#allocation5 + $0x56]]
        %v1337 = vstv %s1336
        %v1338 = vmul.f32 %v1337, %v1079
        %v1339 = vmul.f32 %v1337, %v1080
        %v1342 = vrot.slane %v1338, 5
        %v1343 = vrot.slane %v1339, 5
        %v1344 = vsel %vm533, %v1342, %v1343
        %1345 = vrot.lane.b32.xlu0 %v1344, 126
        %v1346 = vpop.permute.xlu0 %1345
        %v1348 = vadd.f32 %v1284, %v1346
        %s1349 = sld [smem:[#allocation5 + $0x5d]]
        %v1350 = vstv %s1349
        %v1351 = vmul.f32 %v1350, %v1079
        %v1352 = vmul.f32 %v1350, %v1080
        %v1355 = vrot.slane %v1351, 5
        %v1356 = vrot.slane %v1352, 5
        %v1357 = vsel %vm533, %v1355, %v1356
        %1358 = vrot.lane.b32.xlu0 %v1357, 126
        %v1359 = vpop.permute.xlu0 %1358
        %1360 = vrot.lane.b32.xlu0 %v1356, 126
        %v1361 = vpop.permute.xlu0 %1360
        %v1364 = vadd.f32 %v1300, %v1359
        %v1365 = vadd.f32 %v1301, %v1361
        %s1366 = sld [smem:[#allocation5 + $0x34]]
        %v1367 = vstv %s1366
        %v1368 = vmul.f32 %v1367, %v1079
        %v1370 = vrot.slane %v1368, 6
        %1371 = vrot.lane.b32.xlu0 %v1370, 125
        %v1372 = vpop.permute.xlu0 %1371
        %v1374 = vadd.f32 %v1317, %v1372
        %v1375 = vadd.f32 %v1318, %v1372
        %s1376 = sld [smem:[#allocation5 + $0x3b]]
        %v1377 = vstv %s1376
        %v1378 = vmul.f32 %v1377, %v1079
        %v1379 = vmul.f32 %v1377, %v1080
        %v1382 = vrot.slane %v1378, 6
        %v1383 = vrot.slane %v1379, 6
        %v1384 = vsel %vm574, %v1382, %v1383
        %1385 = vrot.lane.b32.xlu0 %v1382, 125
        %v1386 = vpop.permute.xlu0 %1385
        %1387 = vrot.lane.b32.xlu0 %v1384, 125
        %v1388 = vpop.permute.xlu0 %1387
        %v1391 = vadd.f32 %v1334, %v1386
        %v1392 = vadd.f32 %v1335, %v1388
        %s1393 = sld [smem:[#allocation5 + $0x42]]
        %v1394 = vstv %s1393
        %v1395 = vmul.f32 %v1394, %v1079
        %v1396 = vmul.f32 %v1394, %v1080
        %v1399 = vrot.slane %v1395, 2
        %v1400 = vrot.slane %v1396, 2
        %v1401 = vsel %vm592, %v1399, %v1400
        %1402 = vrot.lane.b32.xlu0 %v1401, 125
        %v1403 = vpop.permute.xlu0 %1402
        %v1405 = vadd.f32 %v1348, %v1403
        %s1406 = sld [smem:[#allocation5 + $0x49]]
        %v1407 = vstv %s1406
        %v1408 = vmul.f32 %v1407, %v1079
        %v1409 = vmul.f32 %v1407, %v1080
        %v1412 = vrot.slane %v1408, 2
        %v1413 = vrot.slane %v1409, 2
        %v1414 = vsel %vm592, %v1412, %v1413
        %1415 = vrot.lane.b32.xlu0 %v1414, 125
        %v1416 = vpop.permute.xlu0 %1415
        %1417 = vrot.lane.b32.xlu0 %v1413, 125
        %v1418 = vpop.permute.xlu0 %1417
        %v1421 = vadd.f32 %v1364, %v1416
        %v1422 = vadd.f32 %v1365, %v1418
        %s1423 = sld [smem:[#allocation5 + $0x50]]
        %v1424 = vstv %s1423
        %v1425 = vmul.f32 %v1424, %v1079
        %v1426 = vmul.f32 %v1424, %v1080
        %v1429 = vrot.slane %v1425, 2
        %v1430 = vrot.slane %v1426, 2
        %v1431 = vsel %vm592, %v1429, %v1430
        %1432 = vrot.lane.b32.xlu0 %v1431, 125
        %v1433 = vpop.permute.xlu0 %1432
        %1434 = vrot.lane.b32.xlu0 %v1430, 125
        %v1435 = vpop.permute.xlu0 %1434
        %v1438 = vadd.f32 %v1374, %v1433
        %v1439 = vadd.f32 %v1375, %v1435
        %s1440 = sld [smem:[#allocation5 + $0x57]]
        %v1441 = vstv %s1440
        %v1442 = vmul.f32 %v1441, %v1079
        %v1443 = vmul.f32 %v1441, %v1080
        %v1446 = vrot.slane %v1442, 2
        %v1447 = vrot.slane %v1443, 2
        %v1448 = vsel %vm592, %v1446, %v1447
        %1449 = vrot.lane.b32.xlu0 %v1448, 125
        %v1450 = vpop.permute.xlu0 %1449
        %1451 = vrot.lane.b32.xlu0 %v1447, 125
        %v1452 = vpop.permute.xlu0 %1451
        %v1455 = vadd.f32 %v1391, %v1450
        %v1456 = vadd.f32 %v1392, %v1452
        %s1457 = sld [smem:[#allocation5 + $0x5e]]
        %v1458 = vstv %s1457
        %v1459 = vmul.f32 %v1458, %v1079
        %v1460 = vmul.f32 %v1458, %v1080
        %v1463 = vrot.slane %v1459, 6
        %v1464 = vrot.slane %v1460, 6
        %v1465 = vsel %vm574, %v1463, %v1464
        %1466 = vrot.lane.b32.xlu0 %v1465, 125
        %v1467 = vpop.permute.xlu0 %1466
        %v1469 = vadd.f32 %v1405, %v1467
        %s1470 = sld [smem:[#allocation5 + $0x35]]
        %v1471 = vstv %s1470
        %v1472 = vmul.f32 %v1471, %v1079
        %v1474 = vrot.slane %v1472, 7
        %1475 = vrot.lane.b32.xlu0 %v1474, 124
        %v1476 = vpop.permute.xlu0 %1475
        %v1478 = vadd.f32 %v1421, %v1476
        %v1479 = vadd.f32 %v1422, %v1476
        %s1480 = sld [smem:[#allocation5 + $0x3c]]
        %v1481 = vstv %s1480
        %v1482 = vmul.f32 %v1481, %v1079
        %v1483 = vmul.f32 %v1481, %v1080
        %v1486 = vrot.slane %v1482, 7
        %v1487 = vrot.slane %v1483, 7
        %v1488 = vsel %vm680, %v1486, %v1487
        %1489 = vrot.lane.b32.xlu0 %v1486, 124
        %v1490 = vpop.permute.xlu0 %1489
        %1491 = vrot.lane.b32.xlu0 %v1488, 124
        %v1492 = vpop.permute.xlu0 %1491
        %v1495 = vadd.f32 %v1438, %v1490
        %v1496 = vadd.f32 %v1439, %v1492
        %s1497 = sld [smem:[#allocation5 + $0x43]]
        %v1498 = vstv %s1497
        %v1499 = vmul.f32 %v1498, %v1079
        %v1500 = vmul.f32 %v1498, %v1080
        %v1503 = vrot.slane %v1499, 7
        %v1504 = vrot.slane %v1500, 7
        %v1505 = vsel %vm680, %v1503, %v1504
        %1506 = vrot.lane.b32.xlu0 %v1503, 124
        %v1507 = vpop.permute.xlu0 %1506
        %1508 = vrot.lane.b32.xlu0 %v1505, 124
        %v1509 = vpop.permute.xlu0 %1508
        %v1512 = vadd.f32 %v1455, %v1507
        %v1513 = vadd.f32 %v1456, %v1509
        %s1514 = sld [smem:[#allocation5 + $0x4a]]
        %v1515 = vstv %s1514
        %v1516 = vmul.f32 %v1515, %v1079
        %v1517 = vmul.f32 %v1515, %v1080
        %v1520 = vrot.slane %v1516, 3
        %v1521 = vrot.slane %v1517, 3
        %v1522 = vsel %vm715, %v1520, %v1521
        %1523 = vrot.lane.b32.xlu0 %v1522, 124
        %v1524 = vpop.permute.xlu0 %1523
        %v1526 = vadd.f32 %v1469, %v1524
        %s1527 = sld [smem:[#allocation5 + $0x51]]
        %v1528 = vstv %s1527
        %v1529 = vmul.f32 %v1528, %v1079
        %v1530 = vmul.f32 %v1528, %v1080
        %v1533 = vrot.slane %v1529, 3
        %v1534 = vrot.slane %v1530, 3
        %v1535 = vsel %vm715, %v1533, %v1534
        %1536 = vrot.lane.b32.xlu0 %v1535, 124
        %v1537 = vpop.permute.xlu0 %1536
        %1538 = vrot.lane.b32.xlu0 %v1534, 124
        %v1539 = vpop.permute.xlu0 %1538
        %v1542 = vadd.f32 %v1478, %v1537
        %v1543 = vadd.f32 %v1479, %v1539
        %s1544 = sld [smem:[#allocation5 + $0x58]]
        %v1545 = vstv %s1544
        %v1546 = vmul.f32 %v1545, %v1079
        %v1547 = vmul.f32 %v1545, %v1080
        %v1550 = vrot.slane %v1546, 3
        %v1551 = vrot.slane %v1547, 3
        %v1552 = vsel %vm715, %v1550, %v1551
        %1553 = vrot.lane.b32.xlu0 %v1552, 124
        %v1554 = vpop.permute.xlu0 %1553
        %1555 = vrot.lane.b32.xlu0 %v1551, 124
        %v1556 = vpop.permute.xlu0 %1555
        %v1559 = vadd.f32 %v1495, %v1554
        %v1560 = vadd.f32 %v1496, %v1556
        %s1561 = sld [smem:[#allocation5 + $0x5f]]
        %v1562 = vstv %s1561
        %v1563 = vmul.f32 %v1562, %v1079
        %v1564 = vmul.f32 %v1562, %v1080
        %v1567 = vrot.slane %v1563, 3
        %v1568 = vrot.slane %v1564, 3
        %v1569 = vsel %vm715, %v1567, %v1568
        %1570 = vrot.lane.b32.xlu0 %v1569, 124
        %v1571 = vpop.permute.xlu0 %1570
        %1572 = vrot.lane.b32.xlu0 %v1568, 124
        %v1573 = vpop.permute.xlu0 %1572
        %v1576 = vadd.f32 %v1512, %v1571
        %v1577 = vadd.f32 %v1513, %v1573
        %s1578 = sld [smem:[#allocation5 + $0x36]]
        %v1579 = vstv %s1578
        %v1580 = vmul.f32 %v1579, %v1079
        %1582 = vrot.lane.b32.xlu0 %v1580, 123
        %v1583 = vpop.permute.xlu0 %1582
        %v1585 = vadd.f32 %v1526, %v1583
        %s1586 = sld [smem:[#allocation5 + $0x3d]]
        %v1587 = vstv %s1586
        %v1588 = vmul.f32 %v1587, %v1079
        %v1589 = vmul.f32 %v1587, %v1080
        %1592 = vrot.lane.b32.xlu0 %v1588, 123
        %v1593 = vpop.permute.xlu0 %1592
        %1594 = vrot.lane.b32.xlu0 %v1589, 123
        %v1595 = vpop.permute.xlu0 %1594
        %v1598 = vadd.f32 %v1542, %v1593
        %v1599 = vadd.f32 %v1543, %v1595
        %s1600 = sld [smem:[#allocation5 + $0x44]]
        %v1601 = vstv %s1600
        %v1602 = vmul.f32 %v1601, %v1079
        %v1603 = vmul.f32 %v1601, %v1080
        %1606 = vrot.lane.b32.xlu0 %v1602, 123
        %v1607 = vpop.permute.xlu0 %1606
        %1608 = vrot.lane.b32.xlu0 %v1603, 123
        %v1609 = vpop.permute.xlu0 %1608
        %v1612 = vadd.f32 %v1559, %v1607
        %v1613 = vadd.f32 %v1560, %v1609
        %s1614 = sld [smem:[#allocation5 + $0x4b]]
        %v1615 = vstv %s1614
        %v1616 = vmul.f32 %v1615, %v1079
        %v1617 = vmul.f32 %v1615, %v1080
        %1620 = vrot.lane.b32.xlu0 %v1616, 123
        %v1621 = vpop.permute.xlu0 %1620
        %1622 = vrot.lane.b32.xlu0 %v1617, 123
        %v1623 = vpop.permute.xlu0 %1622
        %v1626 = vadd.f32 %v1576, %v1621
        %v1627 = vadd.f32 %v1577, %v1623
        %s1628 = sld [smem:[#allocation5 + $0x52]]
        %v1629 = vstv %s1628
        %v1630 = vmul.f32 %v1629, %v1079
        %v1631 = vmul.f32 %v1629, %v1080
        %v1634 = vrot.slane %v1630, 4
        %v1635 = vrot.slane %v1631, 4
        %v1636 = vsel %vm291, %v1634, %v1635
        %1637 = vrot.lane.b32.xlu0 %v1636, 123
        %v1638 = vpop.permute.xlu0 %1637
        %v1640 = vadd.f32 %v1585, %v1638
        %s1641 = sld [smem:[#allocation5 + $0x59]]
        %v1642 = vstv %s1641
        %v1643 = vmul.f32 %v1642, %v1079
        %v1644 = vmul.f32 %v1642, %v1080
        %v1647 = vrot.slane %v1643, 4
        %v1648 = vrot.slane %v1644, 4
        %v1649 = vsel %vm291, %v1647, %v1648
        %1650 = vrot.lane.b32.xlu0 %v1649, 123
        %v1651 = vpop.permute.xlu0 %1650
        %1652 = vrot.lane.b32.xlu0 %v1648, 123
        %v1653 = vpop.permute.xlu0 %1652
        %v1656 = vadd.f32 %v1598, %v1651
        %v1657 = vadd.f32 %v1599, %v1653
        %s1658 = sld [smem:[#allocation5 + $0x60]]
        %v1659 = vstv %s1658
        %v1660 = vmul.f32 %v1659, %v1079
        %v1661 = vmul.f32 %v1659, %v1080
        %v1664 = vrot.slane %v1660, 4
        %v1665 = vrot.slane %v1661, 4
        %v1666 = vsel %vm291, %v1664, %v1665
        %1667 = vrot.lane.b32.xlu0 %v1666, 123
        %v1668 = vpop.permute.xlu0 %1667
        %1669 = vrot.lane.b32.xlu0 %v1665, 123
        %v1670 = vpop.permute.xlu0 %1669
        %v1673 = vadd.f32 %v1612, %v1668
        %v1674 = vadd.f32 %v1613, %v1670
        %s1675 = sld [smem:[#allocation5 + $0x37]]
        %v1676 = vstv %s1675
        %v1677 = vmul.f32 %v1676, %v1079
        %v1679 = vrot.slane %v1677, 5
        %1680 = vrot.lane.b32.xlu0 %v1679, 122
        %v1681 = vpop.permute.xlu0 %1680
        %v1683 = vadd.f32 %v1626, %v1681
        %v1684 = vadd.f32 %v1627, %v1681
        %s1685 = sld [smem:[#allocation5 + $0x3e]]
        %v1686 = vstv %s1685
        %v1687 = vmul.f32 %v1686, %v1079
        %v1688 = vmul.f32 %v1686, %v1080
        %v1691 = vrot.slane %v1687, 1
        %v1692 = vrot.slane %v1688, 1
        %v1693 = vsel %vm468, %v1691, %v1692
        %1694 = vrot.lane.b32.xlu0 %v1693, 122
        %v1695 = vpop.permute.xlu0 %1694
        %v1697 = vadd.f32 %v1640, %v1695
        %s1698 = sld [smem:[#allocation5 + $0x45]]
        %v1699 = vstv %s1698
        %v1700 = vmul.f32 %v1699, %v1079
        %v1701 = vmul.f32 %v1699, %v1080
        %v1704 = vrot.slane %v1700, 1
        %v1705 = vrot.slane %v1701, 1
        %v1706 = vsel %vm468, %v1704, %v1705
        %1707 = vrot.lane.b32.xlu0 %v1706, 122
        %v1708 = vpop.permute.xlu0 %1707
        %1709 = vrot.lane.b32.xlu0 %v1705, 122
        %v1710 = vpop.permute.xlu0 %1709
        %v1713 = vadd.f32 %v1656, %v1708
        %v1714 = vadd.f32 %v1657, %v1710
        %s1715 = sld [smem:[#allocation5 + $0x4c]]
        %v1716 = vstv %s1715
        %v1717 = vmul.f32 %v1716, %v1079
        %v1718 = vmul.f32 %v1716, %v1080
        %v1721 = vrot.slane %v1717, 1
        %v1722 = vrot.slane %v1718, 1
        %v1723 = vsel %vm468, %v1721, %v1722
        %1724 = vrot.lane.b32.xlu0 %v1723, 122
        %v1725 = vpop.permute.xlu0 %1724
        %1726 = vrot.lane.b32.xlu0 %v1722, 122
        %v1727 = vpop.permute.xlu0 %1726
        %v1730 = vadd.f32 %v1673, %v1725
        %v1731 = vadd.f32 %v1674, %v1727
        %s1732 = sld [smem:[#allocation5 + $0x53]]
        %v1733 = vstv %s1732
        %v1734 = vmul.f32 %v1733, %v1079
        %v1735 = vmul.f32 %v1733, %v1080
        %v1738 = vrot.slane %v1734, 1
        %v1739 = vrot.slane %v1735, 1
        %v1740 = vsel %vm468, %v1738, %v1739
        %1741 = vrot.lane.b32.xlu0 %v1740, 122
        %v1742 = vpop.permute.xlu0 %1741
        %1743 = vrot.lane.b32.xlu0 %v1739, 122
        %v1744 = vpop.permute.xlu0 %1743
        %v1747 = vadd.f32 %v1683, %v1742
        %v1748 = vadd.f32 %v1684, %v1744
        %s1749 = sld [smem:[#allocation5 + $0x5a]]
        %v1750 = vstv %s1749
        %v1751 = vmul.f32 %v1750, %v1079
        %v1752 = vmul.f32 %v1750, %v1080
        %v1755 = vrot.slane %v1751, 5
        %v1756 = vrot.slane %v1752, 5
        %v1757 = vsel %vm533, %v1755, %v1756
        %1758 = vrot.lane.b32.xlu0 %v1757, 122
        %v1759 = vpop.permute.xlu0 %1758
        %v1761 = vadd.f32 %v1697, %v1759
        %s1762 = sld [smem:[#allocation5 + $0x61]]
        %v1763 = vstv %s1762
        %v1764 = vmul.f32 %v1763, %v1079
        %v1765 = vmul.f32 %v1763, %v1080
        %v1768 = vrot.slane %v1764, 5
        %v1769 = vrot.slane %v1765, 5
        %v1770 = vsel %vm533, %v1768, %v1769
        %1771 = vrot.lane.b32.xlu0 %v1770, 122
        %v1772 = vpop.permute.xlu0 %1771
        %1773 = vrot.lane.b32.xlu0 %v1769, 122
        %v1774 = vpop.permute.xlu0 %1773
        %v1777 = vadd.f32 %v1713, %v1772
        %v1778 = vadd.f32 %v1714, %v1774
        %v1781 = vrot.slane %v1777, 1
        %v1782 = vrot.slane %v1778, 1
        %v1783 = vsel %vm468, %v1781, %v1782
        %v1785 = vadd.f32 %v1761, %v1783
        %v1788 = vrot.slane %v1747, 1
        %v1789 = vrot.slane %v1748, 1
        %v1790 = vsel %vm468, %v1788, %v1789
        %v1793 = vadd.f32 %v1730, %v1790
        %v1794 = vadd.f32 %v1731, %v1789
        %v1797 = vrot.slane %v1793, 2
        %v1798 = vrot.slane %v1794, 2
        %v1799 = vsel %vm592, %v1797, %v1798
        %v1801 = vadd.f32 %v1785, %v1799
        %s1802 = sld [smem:[#allocation4]]
        %v1803 = vstv %s1802
        %v1804 = vadd.f32 %v1801, %v1803
        %v1805 = vxor.u32 %v1804, 2147483648
        %v1806 = vmul.f32 %v1805, 1.442695
        %v1807 = vpow.pop %v1806
        %v1808 = vadd.f32 %v1807, 1.0
        %v1809 = vrcp.pop %v1808
        %v1810 = vmul.f32 1.0, %v1809
        %vm1811 = vcmask 122880
        %1812 = vst.msk [vmem:[#allocation3] sm:$0x1] %vm1811, %v1810
        %1814 = vrot.lane.b32.xlu0 %v1810, 16
        %v1815 = vpop.permute.xlu0 %1814
        %vm1817 = vcmask 255105
        %1818 = vst.msk [vmem:[#allocation3 - $0x1] sm:$0x2] %vm1817, %v1815
        %1819 = vrot.lane.b32.xlu0 %v1810, 32
        %v1820 = vpop.permute.xlu0 %1819
        %vm1822 = vcmask 387330
        %1823 = vst.msk [vmem:[#allocation3 - $0x2] sm:$0x4] %vm1822, %v1820
        %1824 = vrot.lane.b32.xlu0 %v1810, 48
        %v1825 = vpop.permute.xlu0 %1824
        %vm1827 = vcmask 519555
        %1828 = vst.msk [vmem:[#allocation3 - $0x3] sm:$0x8] %vm1827, %v1825
        %1829 = vrot.lane.b32.xlu0 %v1810, 64
        %v1830 = vpop.permute.xlu0 %1829
        %vm1832 = vcmask 651780
        %1833 = vst.msk [vmem:[#allocation3 - $0x4] sm:$0x10] %vm1832, %v1830
        %1834 = vrot.lane.b32.xlu0 %v1810, 80
        %v1835 = vpop.permute.xlu0 %1834
        %vm1837 = vcmask 784005
        %1838 = vst.msk [vmem:[#allocation3 - $0x5] sm:$0x20] %vm1837, %v1835
        %1839 = vrot.lane.b32.xlu0 %v1810, 96
        %v1840 = vpop.permute.xlu0 %1839
        %vm1842 = vcmask 916230
        %1843 = vst.msk [vmem:[#allocation3 - $0x6] sm:$0x40] %vm1842, %v1840
        %1844 = vrot.lane.b32.xlu0 %v1810, 112
        %v1845 = vpop.permute.xlu0 %1844
        %vm1847 = vcmask 1048455
        %1848 = vst.msk [vmem:[#allocation3 - $0x7] sm:$0x80] %vm1847, %v1845
        %v1849 = vld [vmem:[#allocation3] sm:$0x1]
        %v1850 = vld [vmem:[%s260] sm:$0xf]
        %v1852 = vlaneseq
        %v1853 = vshrl.u32 %v1852, 7
        %v1854 = vsub.s32 0, %v1853
        %v1855 = vrot.slane %v1849, %v1854
        %v1857 = vmul.f32 %v1850, %v1855
        %1858 = vst [vmem:[%s277] sm:$0xf] %v1857
        %p1859 = scmp.lt.s32.totalorder %s21, 1
        %s1860 = scalar_select %p1859, %s21, 1
        %p1861 = scmp.lt.s32.totalorder %s22, 1
        %s1862 = scalar_select %p1861, %s22, 1
        %s1863 = smul.addr %s1860, 2
        %s1864 = sadd.s32 %s1862, %s1863
        %s1865 = smul.addr %s1864, 4
        %s1866 = scalar_lea.vmem %s4, %s1865
        // Predicated region
        $region41: #{spatial_gate.1} parent=35 // pred_check
          %p1867 = pneg %p149
        $region42: #{spatial_gate.1} parent=35 // pred_check_branch
          %1869 = sbr.rel (%p1867) target = $region44
        $region43: #{spatial_gate.1} parent=35 // pred_region
          _
        $region44: #{spatial_gate.1} parent=35 // pred_fallthru
          _
      $region36: #{spatial_gate.1} parent=5 // pred_fallthru
        _
      %p1870 = scmp.le.s32.totalorder 2, %s12
      // Predicated region
      $region45: #{spatial_gate.1} parent=5 // pred_check
        %p1871 = pneg %p1870
      $region46: #{spatial_gate.1} parent=5 // pred_check_branch
        %1873 = sbr.rel (%p1871) target = $region48
      $region47: #{spatial_gate.1} parent=5 // pred_region
        %s1874 = ssub.s32 %s12, 2
        // Predicated region
        $region49: #{spatial_gate.1} parent=47 // pred_check
          %p1875 = pneg %p155
        $region50: #{spatial_gate.1} parent=47 // pred_check_branch
          %1877 = sbr.rel (%p1875) target = $region52
        $region51: #{spatial_gate.1} parent=47 // pred_region
          %p1878 = scmp.lt.s32.totalorder %s23, 1
          %s1879 = scalar_select %p1878, %s23, 1
          %p1880 = scmp.lt.s32.totalorder %s24, 1
          %s1881 = scalar_select %p1880, %s24, 1
          %s1882 = smul.addr %s1879, 2
          %s1883 = sadd.s32 %s1881, %s1882
          %s1884 = smul.addr %s1883, 4
          %s1885 = scalar_lea.vmem %s4, %s1884
        $region52: #{spatial_gate.1} parent=47 // pred_fallthru
          _
      $region48: #{spatial_gate.1} parent=5 // pred_fallthru
        _
    $region6: #{spatial_gate.1} parent=1 // loop_footer
      %s16 = sadd.s32 1, %s12
    $region7: #{spatial_gate.1} parent=1 // loop_footer_branch
      %11 = sbr.rel target = $region3
    $region8: #{spatial_gate.1} parent=1 // loop_exit
      _
    %1886 = vsyncpa [#allocation6], 1
    %s1887 = scalar_lea.sflag [#allocation6], 1
    %1888 = vsyncpa %s1887, 1

</llo_original>
